<compile_context>
chip_gen: v7x
topology: tpu7x:2x2x1
jax: 0.10.0
libtpu: 0.0.40
codegen_flags: <defaults>
</compile_context>

<pallas_src>
import functools

import jax
import jax.numpy as jnp
from jax.experimental import pallas as pl
from jax.experimental.pallas import tpu as pltpu


# ---------------------------------------------------------------------------
# Fused kernel: Bblk samples per grid step, whole (Bblk, C, HW) block in VMEM.
# ---------------------------------------------------------------------------
def _se_fused_kernel(x_ref, w1_ref, w2_ref, alpha_ref, o_ref, *, inv_hw):
    bblk, _, hw = x_ref.shape
    w1 = w1_ref[...]                                   # (Cr, C)  f32
    w2 = w2_ref[...]                                   # (C, Cr)  f32
    a = alpha_ref[0]                                   # PReLU slope (SMEM scalar)
    ones = jnp.ones((hw, 1), dtype=x_ref.dtype)        # hoisted out of the loop

    for b in range(bblk):                              # short static unroll
        xb = x_ref[b]                                  # (C, HW), input dtype
        # AdaptiveAvgPool2d(1): spatial sum on the MXU with f32 accumulation.
        pooled = jnp.dot(xb, ones, preferred_element_type=jnp.float32) * inv_hw
        # fc1 (1x1 conv, no bias) -> PReLU -> fc2 -> sigmoid, all on (.,1) cols.
        s1 = jnp.dot(w1, pooled, preferred_element_type=jnp.float32)   # (Cr,1)
        s1 = jnp.where(s1 >= 0.0, s1, a * s1)
        s2 = jnp.dot(w2, s1, preferred_element_type=jnp.float32)       # (C,1)
        gate = jax.nn.sigmoid(s2).astype(o_ref.dtype)                  # (C,1)
        o_ref[b] = xb * gate                           # lane-broadcast multiply


# ---------------------------------------------------------------------------
# Split path, stage 1: squeeze + excitation fused into one reduction kernel.
# grid = (B, HW_tiles); HW axis is the reduction ("arbitrary") axis.
# ---------------------------------------------------------------------------
def _se_excite_kernel(x_ref, w1_ref, w2_ref, alpha_ref, gate_ref, acc_ref,
                      *, hw, inv_hw):
    h = pl.program_id(1)
    thw = x_ref.shape[2]

    @pl.when(h == 0)
    def _():
        acc_ref[...] = jnp.zeros_like(acc_ref)

    x = x_ref[0]                                       # (C, THW)
    # The last HW tile overhangs the array; its tail lanes are undefined in
    # VMEM, so they MUST be masked to zero before the pooling matmul.
    lane = jax.lax.broadcasted_iota(jnp.int32, x.shape, 1) + h * thw
    xm = jnp.where(lane < hw, x, jnp.zeros_like(x))
    ones = jnp.ones((thw, 1), dtype=x.dtype)
    acc_ref[...] += jnp.dot(xm, ones, preferred_element_type=jnp.float32)

    @pl.when(h == pl.num_programs(1) - 1)
    def _():
        pooled = acc_ref[...] * inv_hw                 # (C, 1)  f32
        s1 = jnp.dot(w1_ref[...], pooled, preferred_element_type=jnp.float32)
        a = alpha_ref[0]
        s1 = jnp.where(s1 >= 0.0, s1, a * s1)
        s2 = jnp.dot(w2_ref[...], s1, preferred_element_type=jnp.float32)
        gate_ref[0] = jax.nn.sigmoid(s2).astype(gate_ref.dtype)        # (C, 1)


# ---------------------------------------------------------------------------
# Split path, stage 2: tiled broadcast gating multiply (all axes parallel).
# ---------------------------------------------------------------------------
def _se_gate_kernel(x_ref, g_ref, o_ref):
    # x block: (1, C, THW); gate block: (1, C, 1).  Partial last tile is
    # handled by Pallas' masked writeback.
    o_ref[...] = x_ref[...] * g_ref[...]


def _vmem_capacity_bytes():
    try:
        cap = int(pltpu.get_tpu_info().vmem_capacity_bytes)
        if cap > 0:
            return cap
    except Exception:
        pass
    return 64 << 20   # conservative fallback (v7x per-TensorCore VMEM)


def se_module(x, w1, w2, alpha, *, force_split=False, split_tile_hw=None):
    """x: (B, C, H, W) NCHW; w1: (C//r, C); w2: (C, C//r); alpha: PReLU slope."""
    B, C, H, W = x.shape
    HW = H * W
    Cr = w1.shape[0]
    itemsize = jnp.dtype(x.dtype).itemsize

    x2 = x.reshape(B, C, HW)                    # free reshape, no pad / no copy
    w1f = w1.astype(jnp.float32)
    w2f = w2.astype(jnp.float32)
    # nn.PReLU() default: one shared slope.
    # TODO(synk): per-channel PReLU (num_parameters=C) would need a (C,1) slope.
    alpha = jnp.asarray(alpha, jnp.float32).reshape(-1)[:1]

    # Generation-aware VMEM budgets (v5e/v6e: 128 MiB, v7x: 64 MiB physical).
    vmem_cap = _vmem_capacity_bytes()
    vmem_limit_cap = (vmem_cap * 7) // 8        # headroom for Mosaic scratch
    fused_budget = (vmem_cap * 5) // 8          # fused-vs-split threshold

    # Batch samples per fused grid step so the block is ~1-4 MiB, while keeping
    # the grid length >= 2 (pipelining overlap / v7x megacore work for both TCs).
    per_sample = C * HW * itemsize
    w_bytes = (w1f.size + w2f.size) * 4
    target_blk = min(4 << 20, max(1 << 20, fused_budget // 16))
    bblk = max(1, min(B, target_blk // max(per_sample, 1)))
    if B > 1:
        bblk = min(bblk, (B + 1) // 2)
    while B % bblk != 0:                        # full blocks only
        bblk -= 1
    block_bytes = bblk * per_sample
    # double-buffered in+out blocks + double-buffered weights + temps + margin
    fused_need = 5 * block_bytes + 2 * w_bytes + (4 << 20)

    use_fused = (not force_split) and fused_need <= fused_budget

    if use_fused:
        # ------- fused: single read, single write of x ----------------------
        out = pl.pallas_call(
            functools.partial(_se_fused_kernel, inv_hw=1.0 / HW),
            out_shape=jax.ShapeDtypeStruct((B, C, HW), x.dtype),
            grid=(B // bblk,),
            in_specs=[
                pl.BlockSpec((bblk, C, HW), lambda i: (i, 0, 0)),
                pl.BlockSpec((Cr, C), lambda i: (0, 0)),
                pl.BlockSpec((C, Cr), lambda i: (0, 0)),
                pl.BlockSpec(memory_space=pltpu.SMEM),   # PReLU slope (scalar)
            ],
            out_specs=pl.BlockSpec((bblk, C, HW), lambda i: (i, 0, 0)),
            compiler_params=pltpu.CompilerParams(
                dimension_semantics=("parallel",),
                vmem_limit_bytes=int(min(vmem_limit_cap,
                                         max(fused_need, 16 << 20))),
            ),
        )(x2, w1f, w2f, alpha)
    else:
        # ------- split: Pallas squeeze+excite, then tiled gating ------------
        if split_tile_hw is not None:
            thw = max(128, (int(split_tile_hw) // 128) * 128)
        else:
            lane_budget = max(128, (2 << 20) // max(C * itemsize, 1))
            thw = max(128, (lane_budget // 128) * 128)
        hw_ceil = ((HW + 127) // 128) * 128
        thw = min(thw, hw_ceil)
        n_hw = pl.cdiv(HW, thw)
        tile_bytes = C * thw * itemsize

        gate = pl.pallas_call(
            functools.partial(_se_excite_kernel, hw=HW, inv_hw=1.0 / HW),
            out_shape=jax.ShapeDtypeStruct((B, C, 1), x.dtype),
            grid=(B, n_hw),
            in_specs=[
                pl.BlockSpec((1, C, thw), lambda b, h: (b, 0, h)),
                pl.BlockSpec((Cr, C), lambda b, h: (0, 0)),
                pl.BlockSpec((C, Cr), lambda b, h: (0, 0)),
                pl.BlockSpec(memory_space=pltpu.SMEM),
            ],
            out_specs=pl.BlockSpec((1, C, 1), lambda b, h: (b, 0, 0)),
            scratch_shapes=[pltpu.VMEM((C, 1), jnp.float32)],
            compiler_params=pltpu.CompilerParams(
                dimension_semantics=("parallel", "arbitrary"),
                vmem_limit_bytes=int(min(vmem_limit_cap,
                                         4 * tile_bytes + (8 << 20))),
            ),
        )(x2, w1f, w2f, alpha)

        out = pl.pallas_call(
            _se_gate_kernel,
            out_shape=jax.ShapeDtypeStruct((B, C, HW), x.dtype),
            grid=(B, n_hw),
            in_specs=[
                pl.BlockSpec((1, C, thw), lambda b, h: (b, 0, h)),
                pl.BlockSpec((1, C, 1), lambda b, h: (b, 0, 0)),
            ],
            out_specs=pl.BlockSpec((1, C, thw), lambda b, h: (b, 0, h)),
            compiler_params=pltpu.CompilerParams(
                dimension_semantics=("parallel", "parallel"),
                vmem_limit_bytes=int(min(vmem_limit_cap,
                                         8 * tile_bytes + (8 << 20))),
            ),
        )(x2, gate)

    return out.reshape(B, C, H, W)              # free reshape, no slice


def se_reference(x, w1, w2, alpha):
    # Pure-JAX reference of the PyTorch forward.
    pooled = jnp.mean(x.astype(jnp.float32), axis=(2, 3))           # (B, C)
    s1 = pooled @ w1.astype(jnp.float32).T                          # (B, Cr)
    a = jnp.asarray(alpha, jnp.float32).reshape(-1)[0]
    s1 = jnp.where(s1 >= 0.0, s1, a * s1)
    s2 = s1 @ w2.astype(jnp.float32).T                              # (B, C)
    gate = jax.nn.sigmoid(s2).astype(x.dtype)[:, :, None, None]
    return x * gate


if __name__ == "__main__":
    key = jax.random.PRNGKey(0)
    k = jax.random.split(key, 7)
    reduction = 16
    alpha = jnp.full((1,), 0.25, dtype=jnp.float32)   # PReLU default init

    # A) fused path: batched blocks (bblk > 1), HW a multiple of 128.
    B, C, H, W = 8, 64, 16, 16
    Cr = C // reduction
    x = jax.random.normal(k[0], (B, C, H, W), dtype=jnp.float32)
    w1 = jax.random.normal(k[1], (Cr, C), dtype=jnp.float32) * 0.1
    w2 = jax.random.normal(k[2], (C, Cr), dtype=jnp.float32) * 0.1
    out = jax.block_until_ready(se_module(x, w1, w2, alpha))
    ref = se_reference(x, w1, w2, alpha)
    assert out.shape == x.shape
    assert jnp.allclose(out, ref, atol=1e-4, rtol=1e-4)

    # B) fused path: ragged HW (7x7 = 49), no pad / no slice round-trip.
    B2, C2 = 2, 32
    Cr2 = C2 // reduction
    xb = jax.random.normal(k[3], (B2, C2, 7, 7), dtype=jnp.float32)
    w1b = jax.random.normal(k[4], (Cr2, C2), dtype=jnp.float32) * 0.1
    w2b = jax.random.normal(k[5], (C2, Cr2), dtype=jnp.float32) * 0.1
    outb = jax.block_until_ready(se_module(xb, w1b, w2b, alpha))
    refb = se_reference(xb, w1b, w2b, alpha)
    assert outb.shape == xb.shape
    assert jnp.allclose(outb, refb, atol=1e-4, rtol=1e-4)

    # C) split path (forced): multi-tile HW reduction with a ragged last tile.
    xc = jax.random.normal(k[6], (2, 32, 20, 20), dtype=jnp.float32)
    outc = jax.block_until_ready(
        se_module(xc, w1b, w2b, alpha, force_split=True, split_tile_hw=128))
    refc = se_reference(xc, w1b, w2b, alpha)
    assert outc.shape == xc.shape
    assert jnp.allclose(outc, refc, atol=1e-4, rtol=1e-4)

    print("KERNEL_OK")
</pallas_src>

<mosaic_0001>
module attributes {stable_mosaic.version = 11 : i64} {
  func.func @_se_fused_kernel(%arg0: i32, %arg1: memref<4x64x256xf32, #tpu.memory_space<vmem>>, %arg2: memref<4x64xf32, #tpu.memory_space<vmem>>, %arg3: memref<64x4xf32, #tpu.memory_space<vmem>>, %arg4: memref<1xf32, #tpu.memory_space<smem>>, %arg5: memref<4x64x256xf32, #tpu.memory_space<vmem>>) attributes {dimension_semantics = [#tpu.dimension_semantics<parallel>], iteration_bounds = array<i64: 2>, scalar_prefetch = 0 : i64, scratch_operands = 0 : i64, tpu.core_type = #tpu.core_type<tc>, window_params = [{transform_indices = @transform_0, window_bounds = array<i64: 4, 64, 256>}, {pipeline_mode = #tpu.pipeline_mode<synchronous>, transform_indices = @transform_1, window_bounds = array<i64: 4, 64>}, {pipeline_mode = #tpu.pipeline_mode<synchronous>, transform_indices = @transform_2, window_bounds = array<i64: 64, 4>}, {transform_indices = @transform_3, window_bounds = array<i64: 1>}, {transform_indices = @transform_4, window_bounds = array<i64: 4, 64, 256>}]} {
    %c0 = arith.constant 0 : index
    %c0_0 = arith.constant 0 : index
    %0 = vector.load %arg2[%c0, %c0_0] : memref<4x64xf32, #tpu.memory_space<vmem>>, vector<4x64xf32>
    %c0_1 = arith.constant 0 : index
    %c0_2 = arith.constant 0 : index
    %1 = vector.load %arg3[%c0_1, %c0_2] : memref<64x4xf32, #tpu.memory_space<vmem>>, vector<64x4xf32>
    %c0_3 = arith.constant 0 : index
    %2 = memref.load %arg4[%c0_3] : memref<1xf32, #tpu.memory_space<smem>>
    %cst = arith.constant 1.000000e+00 : f32
    %3 = vector.broadcast %cst : f32 to vector<256x1xf32>
    %c0_4 = arith.constant 0 : index
    %c0_5 = arith.constant 0 : index
    %c0_6 = arith.constant 0 : index
    %4 = vector.load %arg1[%c0_4, %c0_5, %c0_6] : memref<4x64x256xf32, #tpu.memory_space<vmem>>, vector<1x64x256xf32>
    %5 = vector.shape_cast %4 : vector<1x64x256xf32> to vector<64x256xf32>
    %cst_7 = arith.constant dense<0.000000e+00> : vector<64x1xf32>
    %6 = tpu.matmul %5, %3, %cst_7 {dimension_numbers = #tpu.dot_dimension_numbers<[1], [0], [0], [1], [0, 0, 1, 1], [], []>} : vector<64x256xf32>, vector<256x1xf32>, vector<64x1xf32> -> vector<64x1xf32>
    %cst_8 = arith.constant 3.906250e-03 : f32
    %7 = vector.broadcast %cst_8 : f32 to vector<64x1xf32>
    %8 = arith.mulf %6, %7 : vector<64x1xf32>
    %cst_9 = arith.constant dense<0.000000e+00> : vector<4x1xf32>
    %9 = tpu.matmul %0, %8, %cst_9 {dimension_numbers = #tpu.dot_dimension_numbers<[1], [0], [0], [1], [0, 0, 1, 1], [], []>} : vector<4x64xf32>, vector<64x1xf32>, vector<4x1xf32> -> vector<4x1xf32>
    %cst_10 = arith.constant 0.000000e+00 : f32
    %10 = vector.broadcast %cst_10 : f32 to vector<4x1xf32>
    %11 = arith.cmpf oge, %9, %10 : vector<4x1xf32>
    %12 = vector.broadcast %2 : f32 to vector<4x1xf32>
    %13 = arith.mulf %12, %9 : vector<4x1xf32>
    %14 = arith.select %11, %9, %13 : vector<4x1xi1>, vector<4x1xf32>
    %cst_11 = arith.constant dense<0.000000e+00> : vector<64x1xf32>
    %15 = tpu.matmul %1, %14, %cst_11 {dimension_numbers = #tpu.dot_dimension_numbers<[1], [0], [0], [1], [0, 0, 1, 1], [], []>} : vector<64x4xf32>, vector<4x1xf32>, vector<64x1xf32> -> vector<64x1xf32>
    %16 = arith.negf %15 : vector<64x1xf32>
    %17 = math.exp %16 : vector<64x1xf32>
    %cst_12 = arith.constant 1.000000e+00 : f32
    %18 = vector.broadcast %cst_12 : f32 to vector<64x1xf32>
    %19 = arith.addf %18, %17 : vector<64x1xf32>
    %20 = arith.divf %18, %19 : vector<64x1xf32>
    %21 = vector.broadcast %20 : vector<64x1xf32> to vector<64x256xf32>
    %22 = arith.mulf %5, %21 : vector<64x256xf32>
    %c0_13 = arith.constant 0 : index
    %c0_14 = arith.constant 0 : index
    %c0_15 = arith.constant 0 : index
    %23 = vector.load %arg5[%c0_13, %c0_14, %c0_15] : memref<4x64x256xf32, #tpu.memory_space<vmem>>, vector<1x64x256xf32>
    %24 = vector.shape_cast %23 : vector<1x64x256xf32> to vector<64x256xf32>
    %25 = vector.shape_cast %22 : vector<64x256xf32> to vector<1x64x256xf32>
    tpu.vector_store %arg5[%c0_13, %c0_14, %c0_15], %25 {strides = array<i32>} : memref<4x64x256xf32, #tpu.memory_space<vmem>>, vector<1x64x256xf32>,
    %c1 = arith.constant 1 : index
    %c0_16 = arith.constant 0 : index
    %c0_17 = arith.constant 0 : index
    %26 = vector.load %arg1[%c1, %c0_16, %c0_17] : memref<4x64x256xf32, #tpu.memory_space<vmem>>, vector<1x64x256xf32>
    %27 = vector.shape_cast %26 : vector<1x64x256xf32> to vector<64x256xf32>
    %cst_18 = arith.constant dense<0.000000e+00> : vector<64x1xf32>
    %28 = tpu.matmul %27, %3, %cst_18 {dimension_numbers = #tpu.dot_dimension_numbers<[1], [0], [0], [1], [0, 0, 1, 1], [], []>} : vector<64x256xf32>, vector<256x1xf32>, vector<64x1xf32> -> vector<64x1xf32>
    %cst_19 = arith.constant 3.906250e-03 : f32
    %29 = vector.broadcast %cst_19 : f32 to vector<64x1xf32>
    %30 = arith.mulf %28, %29 : vector<64x1xf32>
    %cst_20 = arith.constant dense<0.000000e+00> : vector<4x1xf32>
    %31 = tpu.matmul %0, %30, %cst_20 {dimension_numbers = #tpu.dot_dimension_numbers<[1], [0], [0], [1], [0, 0, 1, 1], [], []>} : vector<4x64xf32>, vector<64x1xf32>, vector<4x1xf32> -> vector<4x1xf32>
    %cst_21 = arith.constant 0.000000e+00 : f32
    %32 = vector.broadcast %cst_21 : f32 to vector<4x1xf32>
    %33 = arith.cmpf oge, %31, %32 : vector<4x1xf32>
    %34 = vector.broadcast %2 : f32 to vector<4x1xf32>
    %35 = arith.mulf %34, %31 : vector<4x1xf32>
    %36 = arith.select %33, %31, %35 : vector<4x1xi1>, vector<4x1xf32>
    %cst_22 = arith.constant dense<0.000000e+00> : vector<64x1xf32>
    %37 = tpu.matmul %1, %36, %cst_22 {dimension_numbers = #tpu.dot_dimension_numbers<[1], [0], [0], [1], [0, 0, 1, 1], [], []>} : vector<64x4xf32>, vector<4x1xf32>, vector<64x1xf32> -> vector<64x1xf32>
    %38 = arith.negf %37 : vector<64x1xf32>
    %39 = math.exp %38 : vector<64x1xf32>
    %cst_23 = arith.constant 1.000000e+00 : f32
    %40 = vector.broadcast %cst_23 : f32 to vector<64x1xf32>
    %41 = arith.addf %40, %39 : vector<64x1xf32>
    %42 = arith.divf %40, %41 : vector<64x1xf32>
    %43 = vector.broadcast %42 : vector<64x1xf32> to vector<64x256xf32>
    %44 = arith.mulf %27, %43 : vector<64x256xf32>
    %c1_24 = arith.constant 1 : index
    %c0_25 = arith.constant 0 : index
    %c0_26 = arith.constant 0 : index
    %45 = vector.load %arg5[%c1_24, %c0_25, %c0_26] : memref<4x64x256xf32, #tpu.memory_space<vmem>>, vector<1x64x256xf32>
    %46 = vector.shape_cast %45 : vector<1x64x256xf32> to vector<64x256xf32>
    %47 = vector.shape_cast %44 : vector<64x256xf32> to vector<1x64x256xf32>
    tpu.vector_store %arg5[%c1_24, %c0_25, %c0_26], %47 {strides = array<i32>} : memref<4x64x256xf32, #tpu.memory_space<vmem>>, vector<1x64x256xf32>,
    %c2 = arith.constant 2 : index
    %c0_27 = arith.constant 0 : index
    %c0_28 = arith.constant 0 : index
    %48 = vector.load %arg1[%c2, %c0_27, %c0_28] : memref<4x64x256xf32, #tpu.memory_space<vmem>>, vector<1x64x256xf32>
    %49 = vector.shape_cast %48 : vector<1x64x256xf32> to vector<64x256xf32>
    %cst_29 = arith.constant dense<0.000000e+00> : vector<64x1xf32>
    %50 = tpu.matmul %49, %3, %cst_29 {dimension_numbers = #tpu.dot_dimension_numbers<[1], [0], [0], [1], [0, 0, 1, 1], [], []>} : vector<64x256xf32>, vector<256x1xf32>, vector<64x1xf32> -> vector<64x1xf32>
    %cst_30 = arith.constant 3.906250e-03 : f32
    %51 = vector.broadcast %cst_30 : f32 to vector<64x1xf32>
    %52 = arith.mulf %50, %51 : vector<64x1xf32>
    %cst_31 = arith.constant dense<0.000000e+00> : vector<4x1xf32>
    %53 = tpu.matmul %0, %52, %cst_31 {dimension_numbers = #tpu.dot_dimension_numbers<[1], [0], [0], [1], [0, 0, 1, 1], [], []>} : vector<4x64xf32>, vector<64x1xf32>, vector<4x1xf32> -> vector<4x1xf32>
    %cst_32 = arith.constant 0.000000e+00 : f32
    %54 = vector.broadcast %cst_32 : f32 to vector<4x1xf32>
    %55 = arith.cmpf oge, %53, %54 : vector<4x1xf32>
    %56 = vector.broadcast %2 : f32 to vector<4x1xf32>
    %57 = arith.mulf %56, %53 : vector<4x1xf32>
    %58 = arith.select %55, %53, %57 : vector<4x1xi1>, vector<4x1xf32>
    %cst_33 = arith.constant dense<0.000000e+00> : vector<64x1xf32>
    %59 = tpu.matmul %1, %58, %cst_33 {dimension_numbers = #tpu.dot_dimension_numbers<[1], [0], [0], [1], [0, 0, 1, 1], [], []>} : vector<64x4xf32>, vector<4x1xf32>, vector<64x1xf32> -> vector<64x1xf32>
    %60 = arith.negf %59 : vector<64x1xf32>
    %61 = math.exp %60 : vector<64x1xf32>
    %cst_34 = arith.constant 1.000000e+00 : f32
    %62 = vector.broadcast %cst_34 : f32 to vector<64x1xf32>
    %63 = arith.addf %62, %61 : vector<64x1xf32>
    %64 = arith.divf %62, %63 : vector<64x1xf32>
    %65 = vector.broadcast %64 : vector<64x1xf32> to vector<64x256xf32>
    %66 = arith.mulf %49, %65 : vector<64x256xf32>
    %c2_35 = arith.constant 2 : index
    %c0_36 = arith.constant 0 : index
    %c0_37 = arith.constant 0 : index
    %67 = vector.load %arg5[%c2_35, %c0_36, %c0_37] : memref<4x64x256xf32, #tpu.memory_space<vmem>>, vector<1x64x256xf32>
    %68 = vector.shape_cast %67 : vector<1x64x256xf32> to vector<64x256xf32>
    %69 = vector.shape_cast %66 : vector<64x256xf32> to vector<1x64x256xf32>
    tpu.vector_store %arg5[%c2_35, %c0_36, %c0_37], %69 {strides = array<i32>} : memref<4x64x256xf32, #tpu.memory_space<vmem>>, vector<1x64x256xf32>,
    %c3 = arith.constant 3 : index
    %c0_38 = arith.constant 0 : index
    %c0_39 = arith.constant 0 : index
    %70 = vector.load %arg1[%c3, %c0_38, %c0_39] : memref<4x64x256xf32, #tpu.memory_space<vmem>>, vector<1x64x256xf32>
    %71 = vector.shape_cast %70 : vector<1x64x256xf32> to vector<64x256xf32>
    %cst_40 = arith.constant dense<0.000000e+00> : vector<64x1xf32>
    %72 = tpu.matmul %71, %3, %cst_40 {dimension_numbers = #tpu.dot_dimension_numbers<[1], [0], [0], [1], [0, 0, 1, 1], [], []>} : vector<64x256xf32>, vector<256x1xf32>, vector<64x1xf32> -> vector<64x1xf32>
    %cst_41 = arith.constant 3.906250e-03 : f32
    %73 = vector.broadcast %cst_41 : f32 to vector<64x1xf32>
    %74 = arith.mulf %72, %73 : vector<64x1xf32>
    %cst_42 = arith.constant dense<0.000000e+00> : vector<4x1xf32>
    %75 = tpu.matmul %0, %74, %cst_42 {dimension_numbers = #tpu.dot_dimension_numbers<[1], [0], [0], [1], [0, 0, 1, 1], [], []>} : vector<4x64xf32>, vector<64x1xf32>, vector<4x1xf32> -> vector<4x1xf32>
    %cst_43 = arith.constant 0.000000e+00 : f32
    %76 = vector.broadcast %cst_43 : f32 to vector<4x1xf32>
    %77 = arith.cmpf oge, %75, %76 : vector<4x1xf32>
    %78 = vector.broadcast %2 : f32 to vector<4x1xf32>
    %79 = arith.mulf %78, %75 : vector<4x1xf32>
    %80 = arith.select %77, %75, %79 : vector<4x1xi1>, vector<4x1xf32>
    %cst_44 = arith.constant dense<0.000000e+00> : vector<64x1xf32>
    %81 = tpu.matmul %1, %80, %cst_44 {dimension_numbers = #tpu.dot_dimension_numbers<[1], [0], [0], [1], [0, 0, 1, 1], [], []>} : vector<64x4xf32>, vector<4x1xf32>, vector<64x1xf32> -> vector<64x1xf32>
    %82 = arith.negf %81 : vector<64x1xf32>
    %83 = math.exp %82 : vector<64x1xf32>
    %cst_45 = arith.constant 1.000000e+00 : f32
    %84 = vector.broadcast %cst_45 : f32 to vector<64x1xf32>
    %85 = arith.addf %84, %83 : vector<64x1xf32>
    %86 = arith.divf %84, %85 : vector<64x1xf32>
    %87 = vector.broadcast %86 : vector<64x1xf32> to vector<64x256xf32>
    %88 = arith.mulf %71, %87 : vector<64x256xf32>
    %c3_46 = arith.constant 3 : index
    %c0_47 = arith.constant 0 : index
    %c0_48 = arith.constant 0 : index
    %89 = vector.load %arg5[%c3_46, %c0_47, %c0_48] : memref<4x64x256xf32, #tpu.memory_space<vmem>>, vector<1x64x256xf32>
    %90 = vector.shape_cast %89 : vector<1x64x256xf32> to vector<64x256xf32>
    %91 = vector.shape_cast %88 : vector<64x256xf32> to vector<1x64x256xf32>
    tpu.vector_store %arg5[%c3_46, %c0_47, %c0_48], %91 {strides = array<i32>} : memref<4x64x256xf32, #tpu.memory_space<vmem>>, vector<1x64x256xf32>,
    return
  }
  func.func @transform_0(%arg0: i32) -> (i32, i32, i32) {
    %c0_i32 = arith.constant 0 : i32
    %c0_i32_0 = arith.constant 0 : i32
    %c0_i32_1 = arith.constant 0 : i32
    return %arg0, %c0_i32, %c0_i32_0 : i32, i32, i32
  }
  func.func @transform_1(%arg0: i32) -> (i32, i32) {
    %c0_i32 = arith.constant 0 : i32
    %c0_i32_0 = arith.constant 0 : i32
    %c0_i32_1 = arith.constant 0 : i32
    return %c0_i32, %c0_i32_0 : i32, i32
  }
  func.func @transform_2(%arg0: i32) -> (i32, i32) {
    %c0_i32 = arith.constant 0 : i32
    %c0_i32_0 = arith.constant 0 : i32
    %c0_i32_1 = arith.constant 0 : i32
    return %c0_i32, %c0_i32_0 : i32, i32
  }
  func.func @transform_3(%arg0: i32) -> i32 {
    %c0_i32 = arith.constant 0 : i32
    %c0_i32_0 = arith.constant 0 : i32
    return %c0_i32 : i32
  }
  func.func @transform_4(%arg0: i32) -> (i32, i32, i32) {
    %c0_i32 = arith.constant 0 : i32
    %c0_i32_0 = arith.constant 0 : i32
    %c0_i32_1 = arith.constant 0 : i32
    return %arg0, %c0_i32, %c0_i32_0 : i32, i32, i32
  }
}

</mosaic_0001>

<llo_original>
// kernel: tpu_custom_call.1
$region0: #{tpu_custom_call.1}
  #allocation0 [shape = 'u32[]', space=smem, size = 0x4, offset = 0x4, fixed_abs, tag = 'smem constant byte address 0x4 - core index']
  #allocation1 [shape = 'u32[144,128]{1,0:T(1,128)}', space=vmem, size = 0x12000, scoped, tag = 'internal scratch']
  #allocation2 [shape = 'f32[1]{0:T(128)S(6)}', space=smem, size = 0x200, scoped, tag = 'scoped memory for tpu_custom_call.1']
  %s0 = inlined_call_operand.hbm [shape: f32[8,64,256], index: 0, kind: input, shape index: {}]
  %s1 = inlined_call_operand.vmem [shape: f32[4,64], index: 1, kind: input, shape index: {}]
  %s2 = inlined_call_operand.vmem [shape: f32[64,4], index: 2, kind: input, shape index: {}]
  %s3 = inlined_call_operand.<no memory space> [shape: f32[1], index: 3, kind: input, shape index: {}]
  %s4 = inlined_call_operand.hbm [shape: f32[8,64,256], index: 4, kind: output, shape index: {}]
  %s5 = sld [smem:[#allocation0]]
  $region53: #{tpu_custom_call.1} parent=0
    _
  %s7 = ssub.s32 1, %s5
  %s8 = scalar_select 0, %s7, %s5
  %9 = sst [smem:[#allocation2]] %s3
  $region1: #{tpu_custom_call.1} parent=0
    #allocation3 [shape = 'u8[524288]{0}', space=vmem, size = 0x80000, scoped, tag = 'input window, operand 0']
    #allocation4 [shape = 's32[2]{0}', space=sflag, size = 0x8, scoped, tag = 'scoped memory for tpu_custom_call.1']
    #allocation5 [shape = 's32[2]{0}', space=sflag, size = 0x8, scoped, tag = 'scoped memory for tpu_custom_call.1']
    #allocation6 [shape = 'u8[524288]{0}', space=vmem, size = 0x80000, scoped, tag = 'output window, operand 0']
    %10 = vsyncpa [#allocation4], 0
    %s11 = scalar_lea.sflag [#allocation4], 1
    %12 = vsyncpa %s11, 0
    %13 = vsyncpa [#allocation5], 0
    %s14 = scalar_lea.sflag [#allocation5], 1
    %15 = vsyncpa %s14, 0
    loop: start=0, step=1, limit=4
    $region2: #{tpu_custom_call.1} parent=1 // loop_pre_header
      _
    $region3: #{tpu_custom_call.1} parent=1 // loop_header
      %s17 = sphi 0, %s21
      %p18 = scmp.ge.s32.totalorder %s17, 4
      %s27 = sphi 0, %s29
      %s30 = sphi 0, %s27
      %s31 = sphi 0, %s30
      %s47 = sphi 0, %s31
      %s51 = sphi 0, %s51
      %s53 = sphi 0, %s51
      %s54 = sphi 0, %s53
      %s68 = sphi 0, %s54
      %s72 = sphi 0, %s72
      %s74 = sphi 0, %s72
      %s75 = sphi 0, %s74
      %s89 = sphi 0, %s75
      %s93 = sphi 0, %s93
      %s95 = sphi 0, %s93
      %s96 = sphi 0, %s95
      %s110 = sphi 0, %s96
      %s116 = sphi 0, %s118
      %s119 = sphi 0, %s116
      %s120 = sphi 0, %s119
      %s136 = sphi 0, %s120
    $region4: #{tpu_custom_call.1} parent=1 // loop_header_branch
      %20 = sbr.rel (%p18) target = $region8
    $region5: #{tpu_custom_call.1} parent=1 // loop_body
      %s22 = ssub.s32 %s17, 1
      %s23 = ssub.s32 %s17, 2
      %s24 = sadd.s32 %s17, 1
      %s25 = ssub.s32 %s17, %s24
      %p26 = scmp.eq.s32.totalorder %s25, 0
      %s28 = sadd.s32 %s27, 1
      %s29 = scalar_select %p26, %s27, %s28
      %p32 = pneg %p26
      %p33 = scmp.eq.s32.totalorder %s17, 1
      %p34 = por %p32, %p33
      %p35 = scmp.ne.s32.totalorder %s27, %s30
      %p36 = scmp.eq.s32.totalorder %s17, 0
      %p37 = por %p35, %p36
      %p38 = scmp.ne.s32.totalorder %s27, %s30
      %p39 = scmp.eq.s32.totalorder %s22, 1
      %p40 = por %p38, %p39
      %p41 = scmp.ne.s32.totalorder %s30, %s31
      %p42 = scmp.eq.s32.totalorder %s22, 0
      %p43 = por %p41, %p42
      %p44 = scmp.ne.s32.totalorder %s30, %s31
      %p45 = scmp.eq.s32.totalorder %s23, 1
      %p46 = por %p44, %p45
      %p48 = scmp.ne.s32.totalorder %s31, %s47
      %p49 = scmp.eq.s32.totalorder %s23, 0
      %p50 = por %p48, %p49
      %s52 = sadd.s32 %s51, 1
      %p55 = scmp.eq.s32.totalorder %s17, 1
      %p56 = scmp.ne.s32.totalorder %s51, %s53
      %p57 = scmp.eq.s32.totalorder %s17, 0
      %p58 = por %p56, %p57
      %p59 = scmp.ne.s32.totalorder %s51, %s53
      %p60 = scmp.eq.s32.totalorder %s22, 1
      %p61 = por %p59, %p60
      %p62 = scmp.ne.s32.totalorder %s53, %s54
      %p63 = scmp.eq.s32.totalorder %s22, 0
      %p64 = por %p62, %p63
      %p65 = scmp.ne.s32.totalorder %s53, %s54
      %p66 = scmp.eq.s32.totalorder %s23, 1
      %p67 = por %p65, %p66
      %p69 = scmp.ne.s32.totalorder %s54, %s68
      %p70 = scmp.eq.s32.totalorder %s23, 0
      %p71 = por %p69, %p70
      %s73 = sadd.s32 %s72, 1
      %p76 = scmp.eq.s32.totalorder %s17, 1
      %p77 = scmp.ne.s32.totalorder %s72, %s74
      %p78 = scmp.eq.s32.totalorder %s17, 0
      %p79 = por %p77, %p78
      %p80 = scmp.ne.s32.totalorder %s72, %s74
      %p81 = scmp.eq.s32.totalorder %s22, 1
      %p82 = por %p80, %p81
      %p83 = scmp.ne.s32.totalorder %s74, %s75
      %p84 = scmp.eq.s32.totalorder %s22, 0
      %p85 = por %p83, %p84
      %p86 = scmp.ne.s32.totalorder %s74, %s75
      %p87 = scmp.eq.s32.totalorder %s23, 1
      %p88 = por %p86, %p87
      %p90 = scmp.ne.s32.totalorder %s75, %s89
      %p91 = scmp.eq.s32.totalorder %s23, 0
      %p92 = por %p90, %p91
      %s94 = sadd.s32 %s93, 1
      %p97 = scmp.eq.s32.totalorder %s17, 1
      %p98 = scmp.ne.s32.totalorder %s93, %s95
      %p99 = scmp.eq.s32.totalorder %s17, 0
      %p100 = por %p98, %p99
      %p101 = scmp.ne.s32.totalorder %s93, %s95
      %p102 = scmp.eq.s32.totalorder %s22, 1
      %p103 = por %p101, %p102
      %p104 = scmp.ne.s32.totalorder %s95, %s96
      %p105 = scmp.eq.s32.totalorder %s22, 0
      %p106 = por %p104, %p105
      %p107 = scmp.ne.s32.totalorder %s95, %s96
      %p108 = scmp.eq.s32.totalorder %s23, 1
      %p109 = por %p107, %p108
      %p111 = scmp.ne.s32.totalorder %s96, %s110
      %p112 = scmp.eq.s32.totalorder %s23, 0
      %p113 = por %p111, %p112
      %s114 = ssub.s32 %s17, %s24
      %p115 = scmp.eq.s32.totalorder %s114, 0
      %s117 = sadd.s32 %s116, 1
      %s118 = scalar_select %p115, %s116, %s117
      %p121 = pneg %p115
      %p122 = scmp.eq.s32.totalorder %s17, 1
      %p123 = por %p121, %p122
      %p124 = scmp.ne.s32.totalorder %s116, %s119
      %p125 = scmp.eq.s32.totalorder %s17, 0
      %p126 = por %p124, %p125
      %p127 = scmp.ne.s32.totalorder %s116, %s119
      %p128 = scmp.eq.s32.totalorder %s22, 1
      %p129 = por %p127, %p128
      %p130 = scmp.ne.s32.totalorder %s119, %s120
      %p131 = scmp.eq.s32.totalorder %s22, 0
      %p132 = por %p130, %p131
      %p133 = scmp.ne.s32.totalorder %s119, %s120
      %p134 = scmp.eq.s32.totalorder %s23, 1
      %p135 = por %p133, %p134
      %p137 = scmp.ne.s32.totalorder %s120, %s136
      %p138 = scmp.eq.s32.totalorder %s23, 0
      %p139 = por %p137, %p138
      %p140 = scmp.le.s32.totalorder 1, %s17
      %p141 = scmp.lt.s32.totalorder %s17, 3
      %p142 = pnand %p140, %p141
      %p143 = pneg %p142
      // Predicated region
      $region9: #{tpu_custom_call.1} parent=5 // pred_check
        _
      $region10: #{tpu_custom_call.1} parent=5 // pred_check_branch
        %145 = sbr.rel (%p142) target = $region12
      $region11: #{tpu_custom_call.1} parent=5 // pred_region
        %s146 = ssub.s32 %s17, 1
        // Predicated region
        $region13: #{tpu_custom_call.1} parent=11 // pred_check
          %p147 = pneg %p64
        $region14: #{tpu_custom_call.1} parent=11 // pred_check_branch
          %149 = sbr.rel (%p147) target = $region16
        $region15: #{tpu_custom_call.1} parent=11 // pred_region
          _
        $region16: #{tpu_custom_call.1} parent=11 // pred_fallthru
          _
        // Predicated region
        $region17: #{tpu_custom_call.1} parent=11 // pred_check
          %p150 = pneg %p85
        $region18: #{tpu_custom_call.1} parent=11 // pred_check_branch
          %152 = sbr.rel (%p150) target = $region20
        $region19: #{tpu_custom_call.1} parent=11 // pred_region
          _
        $region20: #{tpu_custom_call.1} parent=11 // pred_fallthru
          _
        // Predicated region
        $region21: #{tpu_custom_call.1} parent=11 // pred_check
          %p153 = pneg %p106
        $region22: #{tpu_custom_call.1} parent=11 // pred_check_branch
          %155 = sbr.rel (%p153) target = $region24
        $region23: #{tpu_custom_call.1} parent=11 // pred_region
          _
        $region24: #{tpu_custom_call.1} parent=11 // pred_fallthru
          _
      $region12: #{tpu_custom_call.1} parent=5 // pred_fallthru
        _
      %p156 = scmp.lt.s32.totalorder %s17, 2
      // Predicated region
      $region25: #{tpu_custom_call.1} parent=5 // pred_check
        %p157 = pneg %p156
      $region26: #{tpu_custom_call.1} parent=5 // pred_check_branch
        %159 = sbr.rel (%p157) target = $region28
      $region27: #{tpu_custom_call.1} parent=5 // pred_region
        // Predicated region
        $region29: #{tpu_custom_call.1} parent=27 // pred_check
          %p160 = pneg %p37
        $region30: #{tpu_custom_call.1} parent=27 // pred_check_branch
          %162 = sbr.rel (%p160) target = $region32
        $region31: #{tpu_custom_call.1} parent=27 // pred_region
          %s163 = sand.u32 %s27, 1
          %s164 = scalar_lea.sflag [#allocation4], %s163
          %s165 = sand.u32 %s27, 1
          %s166 = smul.addr %s165, 512
          %s167 = scalar_lea.vmem [#allocation3], %s166
          %s168 = smul.u32 4, %s17
          %s170 = ssub.s32 8192, 8192
          %171 = vsyncadd %s164, %s170
          %s172 = smul.addr %s168, 16
          %s173 = smul.addr %s172, 128
          %s174 = scalar_lea.hbm %s0, %s173
          %s175 = sshll.u32 %s167, 4
          %s176 = int_to_ptr.vmem [resolvable:$true] %s175
          %181 = dma.hbm_to_vmem [thread:$0]  %s174, 8192, %s176, %s164, 256, 256, 16
        $region32: #{tpu_custom_call.1} parent=27 // pred_fallthru
          _
      $region28: #{tpu_custom_call.1} parent=5 // pred_fallthru
        _
      %p182 = scmp.le.s32.totalorder 1, %s17
      %p183 = scmp.lt.s32.totalorder %s17, 3
      %p184 = pnand %p182, %p183
      %p185 = pneg %p184
      // Predicated region
      $region33: #{tpu_custom_call.1} parent=5 // pred_check
        _
      $region34: #{tpu_custom_call.1} parent=5 // pred_check_branch
        %187 = sbr.rel (%p184) target = $region36
      $region35: #{tpu_custom_call.1} parent=5 // pred_region
        %s188 = ssub.s32 %s17, 1
        %s189 = sand.u32 %s30, 1
        %s190 = scalar_lea.sflag [#allocation4], %s189
        %s191 = sand.u32 %s30, 1
        %s192 = smul.addr %s191, 512
        %s193 = scalar_lea.vmem [#allocation3], %s192
        // Predicated region
        $region37: #{tpu_custom_call.1} parent=35 // pred_check
          %p194 = pneg %p43
        $region38: #{tpu_custom_call.1} parent=35 // pred_check_branch
          %196 = sbr.rel (%p194) target = $region40
        $region39: #{tpu_custom_call.1} parent=35 // pred_region
          %197 = dma.done %s190, 8192
        $region40: #{tpu_custom_call.1} parent=35 // pred_fallthru
          _
        %s198 = sand.u32 %s30, 1
        %s199 = scalar_lea.sflag [#allocation4], %s198
        %s200 = sand.u32 %s30, 1
        %s201 = smul.addr %s200, 512
        %s202 = scalar_lea.vmem [#allocation3], %s201
        %p203 = pneg %p43
        %p204 = pneg %p40
        %p205 = pneg %p64
        %p206 = pneg %p61
        %p207 = pneg %p85
        %p208 = pneg %p82
        %p209 = pneg %p106
        %p210 = pneg %p103
        %p211 = pneg %p132
        %p212 = pneg %p129
        %s213 = sand.u32 %s119, 1
        %s214 = scalar_lea.sflag [#allocation5], %s213
        %s215 = sand.u32 %s119, 1
        %s216 = smul.addr %s215, 512
        %s217 = scalar_lea.vmem [#allocation6], %s216
        %s218 = smul.u32 4, %s22
        %s219 = smul.u32 4, %s22
        %v220 = vld [vmem:[%s1] sm:$0xf]
        %v221 = vld [vmem:[%s2] sm:$0xff]
        %v222 = vld [vmem:[%s2 + $0x8] sm:$0xff]
        %v223 = vld [vmem:[%s2 + $0x10] sm:$0xff]
        %v224 = vld [vmem:[%s2 + $0x18] sm:$0xff]
        %v225 = vld [vmem:[%s2 + $0x20] sm:$0xff]
        %v226 = vld [vmem:[%s2 + $0x28] sm:$0xff]
        %v227 = vld [vmem:[%s2 + $0x30] sm:$0xff]
        %v228 = vld [vmem:[%s2 + $0x38] sm:$0xff]
        %s229 = sld [smem:[#allocation2]]
        %v230 = vld [vmem:[%s193] sm:$0xff]
        %v231 = vld [vmem:[%s193 + $0x8] sm:$0xff]
        %v232 = vld [vmem:[%s193 + $0x10] sm:$0xff]
        %v233 = vld [vmem:[%s193 + $0x18] sm:$0xff]
        %v234 = vld [vmem:[%s193 + $0x20] sm:$0xff]
        %v235 = vld [vmem:[%s193 + $0x28] sm:$0xff]
        %v236 = vld [vmem:[%s193 + $0x30] sm:$0xff]
        %v237 = vld [vmem:[%s193 + $0x38] sm:$0xff]
        %v238 = vld [vmem:[%s193 + $0x40] sm:$0xff]
        %v239 = vld [vmem:[%s193 + $0x48] sm:$0xff]
        %v240 = vld [vmem:[%s193 + $0x50] sm:$0xff]
        %v241 = vld [vmem:[%s193 + $0x58] sm:$0xff]
        %v242 = vld [vmem:[%s193 + $0x60] sm:$0xff]
        %v243 = vld [vmem:[%s193 + $0x68] sm:$0xff]
        %v244 = vld [vmem:[%s193 + $0x70] sm:$0xff]
        %v245 = vld [vmem:[%s193 + $0x78] sm:$0xff]
        %246 = vmatprep.subr.mxu0 0.0
        %247 = vmatpush1.msra.mxu0 1.0
        %248 = vmatprep.subr.mxu0 0.0
        %249 = vmatpush1.msra.mxu0 1.0
        %250 = vmatprep.subr.mxu0 0.0
        %251 = vmatpush1.msra.mxu0 1.0
        %252 = vmatprep.subr.mxu0 0.0
        %253 = vmatpush1.msra.mxu0 1.0
        %254 = vmatprep.subr.mxu0 0.0
        %255 = vmatpush1.msra.mxu0 1.0
        %256 = vmatprep.subr.mxu0 0.0
        %257 = vmatpush1.msra.mxu0 1.0
        %258 = vmatprep.subr.mxu0 0.0
        %259 = vmatpush1.msra.mxu0 1.0
        %260 = vmatprep.subr.mxu0 0.0
        %261 = vmatpush1.msra.mxu0 1.0
        %262 = vmatprep.subr.mxu0 0.0
        %263 = vmatpush1.msra.mxu0 1.0
        %264 = vmatprep.subr.mxu0 0.0
        %265 = vmatpush1.msra.mxu0 1.0
        %266 = vmatprep.subr.mxu0 0.0
        %267 = vmatpush1.msra.mxu0 1.0
        %268 = vmatprep.subr.mxu0 0.0
        %269 = vmatpush1.msra.mxu0 1.0
        %270 = vmatprep.subr.mxu0 0.0
        %271 = vmatpush1.msra.mxu0 1.0
        %272 = vmatprep.subr.mxu0 0.0
        %273 = vmatpush1.msra.mxu0 1.0
        %274 = vmatprep.subr.mxu0 0.0
        %275 = vmatpush1.msra.mxu0 1.0
        %276 = vmatprep.subr.mxu0 0.0
        %277 = vmatpush1.msra.mxu0 1.0
        %278 = vmatprep.subr.mxu0 0.0
        %279 = vmatpush1.msra.mxu0 1.0
        %280 = vmatprep.subr.mxu0 0.0
        %281 = vmatpush1.msra.mxu0 1.0
        %282 = vmatprep.subr.mxu0 0.0
        %283 = vmatpush1.msra.mxu0 1.0
        %284 = vmatprep.subr.mxu0 0.0
        %285 = vmatpush1.msra.mxu0 1.0
        %286 = vmatprep.subr.mxu0 0.0
        %287 = vmatpush1.msra.mxu0 1.0
        %288 = vmatprep.subr.mxu0 0.0
        %289 = vmatpush1.msra.mxu0 1.0
        %290 = vmatprep.subr.mxu0 0.0
        %291 = vmatpush1.msra.mxu0 1.0
        %292 = vmatprep.subr.mxu0 0.0
        %293 = vmatpush1.msra.mxu0 1.0
        %294 = vmatprep.subr.mxu0 0.0
        %295 = vmatpush1.msra.mxu0 1.0
        %296 = vmatprep.subr.mxu0 0.0
        %297 = vmatpush1.msra.mxu0 1.0
        %298 = vmatprep.subr.mxu0 0.0
        %299 = vmatpush1.msra.mxu0 1.0
        %300 = vmatprep.subr.mxu0 0.0
        %301 = vmatpush1.msra.mxu0 1.0
        %302 = vmatprep.subr.mxu0 0.0
        %303 = vmatpush1.msra.mxu0 1.0
        %304 = vmatprep.subr.mxu0 0.0
        %305 = vmatpush1.msra.mxu0 1.0
        %306 = vmatprep.subr.mxu0 0.0
        %307 = vmatpush1.msra.mxu0 1.0
        %308 = vmatprep.subr.mxu0 0.0
        %309 = vmatpush1.msra.mxu0 1.0
        %310 = vmatprep.mubr.f32.mxu0 %v231
        %311 = vmatmul.mubr.f32.gmra.mrb[0].mxu0 %v230
        %v312 = vpop.f32.mrb[0].mxu0
        %v313 = vadd.f32 0.0, %v312
        %v314 = vpop.f32.mrb[0].mxu0
        %315 = vmatprep.mubr.f32.mxu0 %v233
        %316 = vmatmul.mubr.f32.gmra.mrb[0].mxu0 %v232
        %v317 = vpop.f32.mrb[0].mxu0
        %v318 = vadd.f32 0.0, %v317
        %v319 = vpop.f32.mrb[0].mxu0
        %320 = vmatprep.mubr.f32.mxu0 %v235
        %321 = vmatmul.mubr.f32.gmra.mrb[0].mxu0 %v234
        %v322 = vpop.f32.mrb[0].mxu0
        %v323 = vadd.f32 0.0, %v322
        %v324 = vpop.f32.mrb[0].mxu0
        %325 = vmatprep.mubr.f32.mxu0 %v237
        %326 = vmatmul.mubr.f32.gmra.mrb[0].mxu0 %v236
        %v327 = vpop.f32.mrb[0].mxu0
        %v328 = vadd.f32 0.0, %v327
        %v329 = vpop.f32.mrb[0].mxu0
        %330 = vmatprep.mubr.f32.mxu0 %v239
        %331 = vmatmul.mubr.f32.gmra.mrb[0].mxu0 %v238
        %v332 = vpop.f32.mrb[0].mxu0
        %v333 = vadd.f32 0.0, %v332
        %v334 = vpop.f32.mrb[0].mxu0
        %335 = vmatprep.mubr.f32.mxu0 %v241
        %336 = vmatmul.mubr.f32.gmra.mrb[0].mxu0 %v240
        %v337 = vpop.f32.mrb[0].mxu0
        %v338 = vadd.f32 0.0, %v337
        %v339 = vpop.f32.mrb[0].mxu0
        %340 = vmatprep.mubr.f32.mxu0 %v243
        %341 = vmatmul.mubr.f32.gmra.mrb[0].mxu0 %v242
        %v342 = vpop.f32.mrb[0].mxu0
        %v343 = vadd.f32 0.0, %v342
        %v344 = vpop.f32.mrb[0].mxu0
        %345 = vmatprep.mubr.f32.mxu0 %v245
        %346 = vmatmul.mubr.f32.gmra.mrb[0].mxu0 %v244
        %v347 = vpop.f32.mrb[0].mxu0
        %v348 = vadd.f32 0.0, %v347
        %v349 = vpop.f32.mrb[0].mxu0
        %350 = vdwg.mxu0
        %v351 = vmul.f32 %v313, 0.00390625
        %v352 = vmul.f32 %v318, 0.00390625
        %v353 = vmul.f32 %v323, 0.00390625
        %v354 = vmul.f32 %v328, 0.00390625
        %v355 = vmul.f32 %v333, 0.00390625
        %v356 = vmul.f32 %v338, 0.00390625
        %v357 = vmul.f32 %v343, 0.00390625
        %v358 = vmul.f32 %v348, 0.00390625
        %vm359 = vcmask 523264
        %v361 = vsel %vm359, %v220, 0
        %363 = vmatprep.subr.mxu0 0.0
        %364 = vmatpush1.msra.mxu0 %v351
        %365 = vmatprep.subr.mxu0 0.0
        %366 = vmatpush1.msra.mxu0 %v352
        %367 = vmatprep.subr.mxu0 0.0
        %368 = vmatpush1.msra.mxu0 %v353
        %369 = vmatprep.subr.mxu0 0.0
        %370 = vmatpush1.msra.mxu0 %v354
        %371 = vmatprep.subr.mxu0 0.0
        %372 = vmatpush1.msra.mxu0 %v355
        %373 = vmatprep.subr.mxu0 0.0
        %374 = vmatpush1.msra.mxu0 %v356
        %375 = vmatprep.subr.mxu0 0.0
        %376 = vmatpush1.msra.mxu0 %v357
        %377 = vmatprep.subr.mxu0 0.0
        %378 = vmatpush1.msra.mxu0 %v358
        %379 = vmatprep.subr.mxu0 0.0
        %380 = vmatpush1.msra.mxu0 0.0
        %381 = vmatprep.subr.mxu0 0.0
        %382 = vmatpush1.msra.mxu0 0.0
        %383 = vmatprep.subr.mxu0 0.0
        %384 = vmatpush1.msra.mxu0 0.0
        %385 = vmatprep.subr.mxu0 0.0
        %386 = vmatpush1.msra.mxu0 0.0
        %387 = vmatprep.subr.mxu0 0.0
        %388 = vmatpush1.msra.mxu0 0.0
        %389 = vmatprep.subr.mxu0 0.0
        %390 = vmatpush1.msra.mxu0 0.0
        %391 = vmatprep.subr.mxu0 0.0
        %392 = vmatpush1.msra.mxu0 0.0
        %393 = vmatprep.subr.mxu0 0.0
        %394 = vmatpush1.msra.mxu0 0.0
        %395 = vmatprep.subr.mxu0 0.0
        %396 = vmatpush1.msra.mxu0 0.0
        %397 = vmatprep.subr.mxu0 0.0
        %398 = vmatpush1.msra.mxu0 0.0
        %399 = vmatprep.subr.mxu0 0.0
        %400 = vmatpush1.msra.mxu0 0.0
        %401 = vmatprep.subr.mxu0 0.0
        %402 = vmatpush1.msra.mxu0 0.0
        %403 = vmatprep.subr.mxu0 0.0
        %404 = vmatpush1.msra.mxu0 0.0
        %405 = vmatprep.subr.mxu0 0.0
        %406 = vmatpush1.msra.mxu0 0.0
        %407 = vmatprep.subr.mxu0 0.0
        %408 = vmatpush1.msra.mxu0 0.0
        %409 = vmatprep.subr.mxu0 0.0
        %410 = vmatpush1.msra.mxu0 0.0
        %411 = vmatprep.subr.mxu0 0.0
        %412 = vmatpush1.msra.mxu0 0.0
        %413 = vmatprep.subr.mxu0 0.0
        %414 = vmatpush1.msra.mxu0 0.0
        %415 = vmatprep.subr.mxu0 0.0
        %416 = vmatpush1.msra.mxu0 0.0
        %417 = vmatprep.subr.mxu0 0.0
        %418 = vmatpush1.msra.mxu0 0.0
        %419 = vmatprep.subr.mxu0 0.0
        %420 = vmatpush1.msra.mxu0 0.0
        %421 = vmatprep.subr.mxu0 0.0
        %422 = vmatpush1.msra.mxu0 0.0
        %423 = vmatprep.subr.mxu0 0.0
        %424 = vmatpush1.msra.mxu0 0.0
        %425 = vmatprep.subr.mxu0 0.0
        %426 = vmatpush1.msra.mxu0 0.0
        %427 = vmatprep.mubr.f32.mxu0 0.0
        %428 = vmatmul.mubr.f32.gmra.mrb[0].mxu0 %v361
        %v429 = vpop.f32.mrb[0].mxu0
        %v430 = vadd.f32 0.0, %v429
        %v431 = vpop.f32.mrb[0].mxu0
        %432 = vdwg.mxu0
        %vm433 = vcmp.ge.f32.partialorder %v430, 0.0
        %v434 = vstv %s229
        %v435 = vmul.f32 %v434, %v430
        %v436 = vsel %vm433, %v430, %v435
        %vm437 = vcmask 31744
        %v439 = vsel %vm437, %v221, 0
        %v442 = vsel %vm437, %v222, 0
        %v445 = vsel %vm437, %v223, 0
        %v448 = vsel %vm437, %v224, 0
        %v451 = vsel %vm437, %v225, 0
        %v454 = vsel %vm437, %v226, 0
        %v457 = vsel %vm437, %v227, 0
        %v460 = vsel %vm437, %v228, 0
        %vm462 = vcmask 1043456
        %v464 = vsel %vm462, %v436, 0
        %466 = vmatprep.subr.mxu0 0.0
        %467 = vmatpush1.msra.mxu0 %v464
        %468 = vmatprep.subr.mxu0 0.0
        %469 = vmatpush1.msra.mxu0 0.0
        %470 = vmatprep.subr.mxu0 0.0
        %471 = vmatpush1.msra.mxu0 0.0
        %472 = vmatprep.subr.mxu0 0.0
        %473 = vmatpush1.msra.mxu0 0.0
        %474 = vmatprep.subr.mxu0 0.0
        %475 = vmatpush1.msra.mxu0 0.0
        %476 = vmatprep.subr.mxu0 0.0
        %477 = vmatpush1.msra.mxu0 0.0
        %478 = vmatprep.subr.mxu0 0.0
        %479 = vmatpush1.msra.mxu0 0.0
        %480 = vmatprep.subr.mxu0 0.0
        %481 = vmatpush1.msra.mxu0 0.0
        %482 = vmatprep.subr.mxu0 0.0
        %483 = vmatpush1.msra.mxu0 0.0
        %484 = vmatprep.subr.mxu0 0.0
        %485 = vmatpush1.msra.mxu0 0.0
        %486 = vmatprep.subr.mxu0 0.0
        %487 = vmatpush1.msra.mxu0 0.0
        %488 = vmatprep.subr.mxu0 0.0
        %489 = vmatpush1.msra.mxu0 0.0
        %490 = vmatprep.subr.mxu0 0.0
        %491 = vmatpush1.msra.mxu0 0.0
        %492 = vmatprep.subr.mxu0 0.0
        %493 = vmatpush1.msra.mxu0 0.0
        %494 = vmatprep.subr.mxu0 0.0
        %495 = vmatpush1.msra.mxu0 0.0
        %496 = vmatprep.subr.mxu0 0.0
        %497 = vmatpush1.msra.mxu0 0.0
        %498 = vmatprep.subr.mxu0 0.0
        %499 = vmatpush1.msra.mxu0 0.0
        %500 = vmatprep.subr.mxu0 0.0
        %501 = vmatpush1.msra.mxu0 0.0
        %502 = vmatprep.subr.mxu0 0.0
        %503 = vmatpush1.msra.mxu0 0.0
        %504 = vmatprep.subr.mxu0 0.0
        %505 = vmatpush1.msra.mxu0 0.0
        %506 = vmatprep.subr.mxu0 0.0
        %507 = vmatpush1.msra.mxu0 0.0
        %508 = vmatprep.subr.mxu0 0.0
        %509 = vmatpush1.msra.mxu0 0.0
        %510 = vmatprep.subr.mxu0 0.0
        %511 = vmatpush1.msra.mxu0 0.0
        %512 = vmatprep.subr.mxu0 0.0
        %513 = vmatpush1.msra.mxu0 0.0
        %514 = vmatprep.subr.mxu0 0.0
        %515 = vmatpush1.msra.mxu0 0.0
        %516 = vmatprep.subr.mxu0 0.0
        %517 = vmatpush1.msra.mxu0 0.0
        %518 = vmatprep.subr.mxu0 0.0
        %519 = vmatpush1.msra.mxu0 0.0
        %520 = vmatprep.subr.mxu0 0.0
        %521 = vmatpush1.msra.mxu0 0.0
        %522 = vmatprep.subr.mxu0 0.0
        %523 = vmatpush1.msra.mxu0 0.0
        %524 = vmatprep.subr.mxu0 0.0
        %525 = vmatpush1.msra.mxu0 0.0
        %526 = vmatprep.subr.mxu0 0.0
        %527 = vmatpush1.msra.mxu0 0.0
        %528 = vmatprep.subr.mxu0 0.0
        %529 = vmatpush1.msra.mxu0 0.0
        %530 = vmatprep.mubr.f32.mxu0 0.0
        %531 = vmatmul.mubr.f32.gmra.mrb[0].mxu0 %v439
        %v532 = vpop.f32.mrb[0].mxu0
        %v533 = vadd.f32 0.0, %v532
        %v534 = vpop.f32.mrb[0].mxu0
        %535 = vmatprep.mubr.f32.mxu0 0.0
        %536 = vmatmul.mubr.f32.gmra.mrb[0].mxu0 %v442
        %v537 = vpop.f32.mrb[0].mxu0
        %v538 = vadd.f32 0.0, %v537
        %v539 = vpop.f32.mrb[0].mxu0
        %540 = vmatprep.mubr.f32.mxu0 0.0
        %541 = vmatmul.mubr.f32.gmra.mrb[0].mxu0 %v445
        %v542 = vpop.f32.mrb[0].mxu0
        %v543 = vadd.f32 0.0, %v542
        %v544 = vpop.f32.mrb[0].mxu0
        %545 = vmatprep.mubr.f32.mxu0 0.0
        %546 = vmatmul.mubr.f32.gmra.mrb[0].mxu0 %v448
        %v547 = vpop.f32.mrb[0].mxu0
        %v548 = vadd.f32 0.0, %v547
        %v549 = vpop.f32.mrb[0].mxu0
        %550 = vmatprep.mubr.f32.mxu0 0.0
        %551 = vmatmul.mubr.f32.gmra.mrb[0].mxu0 %v451
        %v552 = vpop.f32.mrb[0].mxu0
        %v553 = vadd.f32 0.0, %v552
        %v554 = vpop.f32.mrb[0].mxu0
        %555 = vmatprep.mubr.f32.mxu0 0.0
        %556 = vmatmul.mubr.f32.gmra.mrb[0].mxu0 %v454
        %v557 = vpop.f32.mrb[0].mxu0
        %v558 = vadd.f32 0.0, %v557
        %v559 = vpop.f32.mrb[0].mxu0
        %560 = vmatprep.mubr.f32.mxu0 0.0
        %561 = vmatmul.mubr.f32.gmra.mrb[0].mxu0 %v457
        %v562 = vpop.f32.mrb[0].mxu0
        %v563 = vadd.f32 0.0, %v562
        %v564 = vpop.f32.mrb[0].mxu0
        %565 = vmatprep.mubr.f32.mxu0 0.0
        %566 = vmatmul.mubr.f32.gmra.mrb[0].mxu0 %v460
        %v567 = vpop.f32.mrb[0].mxu0
        %v568 = vadd.f32 0.0, %v567
        %v569 = vpop.f32.mrb[0].mxu0
        %570 = vdwg.mxu0
        %v571 = vxor.u32 %v533, 2147483648
        %v572 = vxor.u32 %v538, 2147483648
        %v573 = vxor.u32 %v543, 2147483648
        %v574 = vxor.u32 %v548, 2147483648
        %v575 = vxor.u32 %v553, 2147483648
        %v576 = vxor.u32 %v558, 2147483648
        %v577 = vxor.u32 %v563, 2147483648
        %v578 = vxor.u32 %v568, 2147483648
        %v579 = vmul.f32 %v571, 1.442695
        %v580 = vpow.pop %v579
        %v581 = vmul.f32 %v572, 1.442695
        %v582 = vpow.pop %v581
        %v583 = vmul.f32 %v573, 1.442695
        %v584 = vpow.pop %v583
        %v585 = vmul.f32 %v574, 1.442695
        %v586 = vpow.pop %v585
        %v587 = vmul.f32 %v575, 1.442695
        %v588 = vpow.pop %v587
        %v589 = vmul.f32 %v576, 1.442695
        %v590 = vpow.pop %v589
        %v591 = vmul.f32 %v577, 1.442695
        %v592 = vpow.pop %v591
        %v593 = vmul.f32 %v578, 1.442695
        %v594 = vpow.pop %v593
        %v595 = vadd.f32 %v580, 1.0
        %v596 = vadd.f32 %v582, 1.0
        %v597 = vadd.f32 %v584, 1.0
        %v598 = vadd.f32 %v586, 1.0
        %v599 = vadd.f32 %v588, 1.0
        %v600 = vadd.f32 %v590, 1.0
        %v601 = vadd.f32 %v592, 1.0
        %v602 = vadd.f32 %v594, 1.0
        %v603 = vrcp.pop %v595
        %v604 = vmul.f32 1.0, %v603
        %v605 = vrcp.pop %v596
        %v606 = vmul.f32 1.0, %v605
        %v607 = vrcp.pop %v597
        %v608 = vmul.f32 1.0, %v607
        %v609 = vrcp.pop %v598
        %v610 = vmul.f32 1.0, %v609
        %v611 = vrcp.pop %v599
        %v612 = vmul.f32 1.0, %v611
        %v613 = vrcp.pop %v600
        %v614 = vmul.f32 1.0, %v613
        %v615 = vrcp.pop %v601
        %v616 = vmul.f32 1.0, %v615
        %v617 = vrcp.pop %v602
        %v618 = vmul.f32 1.0, %v617
        %620 = vset.pattern.permute.xlu0 0
        %621 = vperm.xlu0 %620, %v604
        %v622 = vpop.permute.xlu0 %621
        %625 = vset.pattern.permute.xlu0 0
        %626 = vperm.xlu0 %625, %v606
        %v627 = vpop.permute.xlu0 %626
        %630 = vset.pattern.permute.xlu0 0
        %631 = vperm.xlu0 %630, %v608
        %v632 = vpop.permute.xlu0 %631
        %635 = vset.pattern.permute.xlu0 0
        %636 = vperm.xlu0 %635, %v610
        %v637 = vpop.permute.xlu0 %636
        %640 = vset.pattern.permute.xlu0 0
        %641 = vperm.xlu0 %640, %v612
        %v642 = vpop.permute.xlu0 %641
        %645 = vset.pattern.permute.xlu0 0
        %646 = vperm.xlu0 %645, %v614
        %v647 = vpop.permute.xlu0 %646
        %650 = vset.pattern.permute.xlu0 0
        %651 = vperm.xlu0 %650, %v616
        %v652 = vpop.permute.xlu0 %651
        %655 = vset.pattern.permute.xlu0 0
        %656 = vperm.xlu0 %655, %v618
        %v657 = vpop.permute.xlu0 %656
        %v659 = vmul.f32 %v230, %v622
        %v660 = vmul.f32 %v231, %v622
        %v661 = vmul.f32 %v232, %v627
        %v662 = vmul.f32 %v233, %v627
        %v663 = vmul.f32 %v234, %v632
        %v664 = vmul.f32 %v235, %v632
        %v665 = vmul.f32 %v236, %v637
        %v666 = vmul.f32 %v237, %v637
        %v667 = vmul.f32 %v238, %v642
        %v668 = vmul.f32 %v239, %v642
        %v669 = vmul.f32 %v240, %v647
        %v670 = vmul.f32 %v241, %v647
        %v671 = vmul.f32 %v242, %v652
        %v672 = vmul.f32 %v243, %v652
        %v673 = vmul.f32 %v244, %v657
        %v674 = vmul.f32 %v245, %v657
        %675 = vst [vmem:[%s217] sm:$0xff] %v659
        %676 = vst [vmem:[%s217 + $0x8] sm:$0xff] %v660
        %677 = vst [vmem:[%s217 + $0x10] sm:$0xff] %v661
        %678 = vst [vmem:[%s217 + $0x18] sm:$0xff] %v662
        %679 = vst [vmem:[%s217 + $0x20] sm:$0xff] %v663
        %680 = vst [vmem:[%s217 + $0x28] sm:$0xff] %v664
        %681 = vst [vmem:[%s217 + $0x30] sm:$0xff] %v665
        %682 = vst [vmem:[%s217 + $0x38] sm:$0xff] %v666
        %683 = vst [vmem:[%s217 + $0x40] sm:$0xff] %v667
        %684 = vst [vmem:[%s217 + $0x48] sm:$0xff] %v668
        %685 = vst [vmem:[%s217 + $0x50] sm:$0xff] %v669
        %686 = vst [vmem:[%s217 + $0x58] sm:$0xff] %v670
        %687 = vst [vmem:[%s217 + $0x60] sm:$0xff] %v671
        %688 = vst [vmem:[%s217 + $0x68] sm:$0xff] %v672
        %689 = vst [vmem:[%s217 + $0x70] sm:$0xff] %v673
        %690 = vst [vmem:[%s217 + $0x78] sm:$0xff] %v674
        %s691 = scalar_lea.vmem %s193, 128 [#allocation3]
        %v692 = vld [vmem:[%s691] sm:$0xff]
        %v693 = vld [vmem:[%s691 + $0x8] sm:$0xff]
        %v694 = vld [vmem:[%s691 + $0x10] sm:$0xff]
        %v695 = vld [vmem:[%s691 + $0x18] sm:$0xff]
        %v696 = vld [vmem:[%s691 + $0x20] sm:$0xff]
        %v697 = vld [vmem:[%s691 + $0x28] sm:$0xff]
        %v698 = vld [vmem:[%s691 + $0x30] sm:$0xff]
        %v699 = vld [vmem:[%s691 + $0x38] sm:$0xff]
        %v700 = vld [vmem:[%s691 + $0x40] sm:$0xff]
        %v701 = vld [vmem:[%s691 + $0x48] sm:$0xff]
        %v702 = vld [vmem:[%s691 + $0x50] sm:$0xff]
        %v703 = vld [vmem:[%s691 + $0x58] sm:$0xff]
        %v704 = vld [vmem:[%s691 + $0x60] sm:$0xff]
        %v705 = vld [vmem:[%s691 + $0x68] sm:$0xff]
        %v706 = vld [vmem:[%s691 + $0x70] sm:$0xff]
        %v707 = vld [vmem:[%s691 + $0x78] sm:$0xff]
        %708 = vmatprep.subr.mxu0 0.0
        %709 = vmatpush1.msra.mxu0 1.0
        %710 = vmatprep.subr.mxu0 0.0
        %711 = vmatpush1.msra.mxu0 1.0
        %712 = vmatprep.subr.mxu0 0.0
        %713 = vmatpush1.msra.mxu0 1.0
        %714 = vmatprep.subr.mxu0 0.0
        %715 = vmatpush1.msra.mxu0 1.0
        %716 = vmatprep.subr.mxu0 0.0
        %717 = vmatpush1.msra.mxu0 1.0
        %718 = vmatprep.subr.mxu0 0.0
        %719 = vmatpush1.msra.mxu0 1.0
        %720 = vmatprep.subr.mxu0 0.0
        %721 = vmatpush1.msra.mxu0 1.0
        %722 = vmatprep.subr.mxu0 0.0
        %723 = vmatpush1.msra.mxu0 1.0
        %724 = vmatprep.subr.mxu0 0.0
        %725 = vmatpush1.msra.mxu0 1.0
        %726 = vmatprep.subr.mxu0 0.0
        %727 = vmatpush1.msra.mxu0 1.0
        %728 = vmatprep.subr.mxu0 0.0
        %729 = vmatpush1.msra.mxu0 1.0
        %730 = vmatprep.subr.mxu0 0.0
        %731 = vmatpush1.msra.mxu0 1.0
        %732 = vmatprep.subr.mxu0 0.0
        %733 = vmatpush1.msra.mxu0 1.0
        %734 = vmatprep.subr.mxu0 0.0
        %735 = vmatpush1.msra.mxu0 1.0
        %736 = vmatprep.subr.mxu0 0.0
        %737 = vmatpush1.msra.mxu0 1.0
        %738 = vmatprep.subr.mxu0 0.0
        %739 = vmatpush1.msra.mxu0 1.0
        %740 = vmatprep.subr.mxu0 0.0
        %741 = vmatpush1.msra.mxu0 1.0
        %742 = vmatprep.subr.mxu0 0.0
        %743 = vmatpush1.msra.mxu0 1.0
        %744 = vmatprep.subr.mxu0 0.0
        %745 = vmatpush1.msra.mxu0 1.0
        %746 = vmatprep.subr.mxu0 0.0
        %747 = vmatpush1.msra.mxu0 1.0
        %748 = vmatprep.subr.mxu0 0.0
        %749 = vmatpush1.msra.mxu0 1.0
        %750 = vmatprep.subr.mxu0 0.0
        %751 = vmatpush1.msra.mxu0 1.0
        %752 = vmatprep.subr.mxu0 0.0
        %753 = vmatpush1.msra.mxu0 1.0
        %754 = vmatprep.subr.mxu0 0.0
        %755 = vmatpush1.msra.mxu0 1.0
        %756 = vmatprep.subr.mxu0 0.0
        %757 = vmatpush1.msra.mxu0 1.0
        %758 = vmatprep.subr.mxu0 0.0
        %759 = vmatpush1.msra.mxu0 1.0
        %760 = vmatprep.subr.mxu0 0.0
        %761 = vmatpush1.msra.mxu0 1.0
        %762 = vmatprep.subr.mxu0 0.0
        %763 = vmatpush1.msra.mxu0 1.0
        %764 = vmatprep.subr.mxu0 0.0
        %765 = vmatpush1.msra.mxu0 1.0
        %766 = vmatprep.subr.mxu0 0.0
        %767 = vmatpush1.msra.mxu0 1.0
        %768 = vmatprep.subr.mxu0 0.0
        %769 = vmatpush1.msra.mxu0 1.0
        %770 = vmatprep.subr.mxu0 0.0
        %771 = vmatpush1.msra.mxu0 1.0
        %772 = vmatprep.mubr.f32.mxu0 %v693
        %773 = vmatmul.mubr.f32.gmra.mrb[0].mxu0 %v692
        %v774 = vpop.f32.mrb[0].mxu0
        %v775 = vadd.f32 0.0, %v774
        %v776 = vpop.f32.mrb[0].mxu0
        %777 = vmatprep.mubr.f32.mxu0 %v695
        %778 = vmatmul.mubr.f32.gmra.mrb[0].mxu0 %v694
        %v779 = vpop.f32.mrb[0].mxu0
        %v780 = vadd.f32 0.0, %v779
        %v781 = vpop.f32.mrb[0].mxu0
        %782 = vmatprep.mubr.f32.mxu0 %v697
        %783 = vmatmul.mubr.f32.gmra.mrb[0].mxu0 %v696
        %v784 = vpop.f32.mrb[0].mxu0
        %v785 = vadd.f32 0.0, %v784
        %v786 = vpop.f32.mrb[0].mxu0
        %787 = vmatprep.mubr.f32.mxu0 %v699
        %788 = vmatmul.mubr.f32.gmra.mrb[0].mxu0 %v698
        %v789 = vpop.f32.mrb[0].mxu0
        %v790 = vadd.f32 0.0, %v789
        %v791 = vpop.f32.mrb[0].mxu0
        %792 = vmatprep.mubr.f32.mxu0 %v701
        %793 = vmatmul.mubr.f32.gmra.mrb[0].mxu0 %v700
        %v794 = vpop.f32.mrb[0].mxu0
        %v795 = vadd.f32 0.0, %v794
        %v796 = vpop.f32.mrb[0].mxu0
        %797 = vmatprep.mubr.f32.mxu0 %v703
        %798 = vmatmul.mubr.f32.gmra.mrb[0].mxu0 %v702
        %v799 = vpop.f32.mrb[0].mxu0
        %v800 = vadd.f32 0.0, %v799
        %v801 = vpop.f32.mrb[0].mxu0
        %802 = vmatprep.mubr.f32.mxu0 %v705
        %803 = vmatmul.mubr.f32.gmra.mrb[0].mxu0 %v704
        %v804 = vpop.f32.mrb[0].mxu0
        %v805 = vadd.f32 0.0, %v804
        %v806 = vpop.f32.mrb[0].mxu0
        %807 = vmatprep.mubr.f32.mxu0 %v707
        %808 = vmatmul.mubr.f32.gmra.mrb[0].mxu0 %v706
        %v809 = vpop.f32.mrb[0].mxu0
        %v810 = vadd.f32 0.0, %v809
        %v811 = vpop.f32.mrb[0].mxu0
        %812 = vdwg.mxu0
        %v813 = vmul.f32 %v775, 0.00390625
        %v814 = vmul.f32 %v780, 0.00390625
        %v815 = vmul.f32 %v785, 0.00390625
        %v816 = vmul.f32 %v790, 0.00390625
        %v817 = vmul.f32 %v795, 0.00390625
        %v818 = vmul.f32 %v800, 0.00390625
        %v819 = vmul.f32 %v805, 0.00390625
        %v820 = vmul.f32 %v810, 0.00390625
        %821 = vmatprep.subr.mxu0 0.0
        %822 = vmatpush1.msra.mxu0 %v813
        %823 = vmatprep.subr.mxu0 0.0
        %824 = vmatpush1.msra.mxu0 %v814
        %825 = vmatprep.subr.mxu0 0.0
        %826 = vmatpush1.msra.mxu0 %v815
        %827 = vmatprep.subr.mxu0 0.0
        %828 = vmatpush1.msra.mxu0 %v816
        %829 = vmatprep.subr.mxu0 0.0
        %830 = vmatpush1.msra.mxu0 %v817
        %831 = vmatprep.subr.mxu0 0.0
        %832 = vmatpush1.msra.mxu0 %v818
        %833 = vmatprep.subr.mxu0 0.0
        %834 = vmatpush1.msra.mxu0 %v819
        %835 = vmatprep.subr.mxu0 0.0
        %836 = vmatpush1.msra.mxu0 %v820
        %837 = vmatprep.subr.mxu0 0.0
        %838 = vmatpush1.msra.mxu0 0.0
        %839 = vmatprep.subr.mxu0 0.0
        %840 = vmatpush1.msra.mxu0 0.0
        %841 = vmatprep.subr.mxu0 0.0
        %842 = vmatpush1.msra.mxu0 0.0
        %843 = vmatprep.subr.mxu0 0.0
        %844 = vmatpush1.msra.mxu0 0.0
        %845 = vmatprep.subr.mxu0 0.0
        %846 = vmatpush1.msra.mxu0 0.0
        %847 = vmatprep.subr.mxu0 0.0
        %848 = vmatpush1.msra.mxu0 0.0
        %849 = vmatprep.subr.mxu0 0.0
        %850 = vmatpush1.msra.mxu0 0.0
        %851 = vmatprep.subr.mxu0 0.0
        %852 = vmatpush1.msra.mxu0 0.0
        %853 = vmatprep.subr.mxu0 0.0
        %854 = vmatpush1.msra.mxu0 0.0
        %855 = vmatprep.subr.mxu0 0.0
        %856 = vmatpush1.msra.mxu0 0.0
        %857 = vmatprep.subr.mxu0 0.0
        %858 = vmatpush1.msra.mxu0 0.0
        %859 = vmatprep.subr.mxu0 0.0
        %860 = vmatpush1.msra.mxu0 0.0
        %861 = vmatprep.subr.mxu0 0.0
        %862 = vmatpush1.msra.mxu0 0.0
        %863 = vmatprep.subr.mxu0 0.0
        %864 = vmatpush1.msra.mxu0 0.0
        %865 = vmatprep.subr.mxu0 0.0
        %866 = vmatpush1.msra.mxu0 0.0
        %867 = vmatprep.subr.mxu0 0.0
        %868 = vmatpush1.msra.mxu0 0.0
        %869 = vmatprep.subr.mxu0 0.0
        %870 = vmatpush1.msra.mxu0 0.0
        %871 = vmatprep.subr.mxu0 0.0
        %872 = vmatpush1.msra.mxu0 0.0
        %873 = vmatprep.subr.mxu0 0.0
        %874 = vmatpush1.msra.mxu0 0.0
        %875 = vmatprep.subr.mxu0 0.0
        %876 = vmatpush1.msra.mxu0 0.0
        %877 = vmatprep.subr.mxu0 0.0
        %878 = vmatpush1.msra.mxu0 0.0
        %879 = vmatprep.subr.mxu0 0.0
        %880 = vmatpush1.msra.mxu0 0.0
        %881 = vmatprep.subr.mxu0 0.0
        %882 = vmatpush1.msra.mxu0 0.0
        %883 = vmatprep.subr.mxu0 0.0
        %884 = vmatpush1.msra.mxu0 0.0
        %885 = vmatprep.mubr.f32.mxu0 0.0
        %886 = vmatmul.mubr.f32.gmra.mrb[0].mxu0 %v361
        %v887 = vpop.f32.mrb[0].mxu0
        %v888 = vadd.f32 0.0, %v887
        %v889 = vpop.f32.mrb[0].mxu0
        %890 = vdwg.mxu0
        %vm891 = vcmp.ge.f32.partialorder %v888, 0.0
        %v892 = vmul.f32 %v434, %v888
        %v893 = vsel %vm891, %v888, %v892
        %v895 = vsel %vm462, %v893, 0
        %897 = vmatprep.subr.mxu0 0.0
        %898 = vmatpush1.msra.mxu0 %v895
        %899 = vmatprep.subr.mxu0 0.0
        %900 = vmatpush1.msra.mxu0 0.0
        %901 = vmatprep.subr.mxu0 0.0
        %902 = vmatpush1.msra.mxu0 0.0
        %903 = vmatprep.subr.mxu0 0.0
        %904 = vmatpush1.msra.mxu0 0.0
        %905 = vmatprep.subr.mxu0 0.0
        %906 = vmatpush1.msra.mxu0 0.0
        %907 = vmatprep.subr.mxu0 0.0
        %908 = vmatpush1.msra.mxu0 0.0
        %909 = vmatprep.subr.mxu0 0.0
        %910 = vmatpush1.msra.mxu0 0.0
        %911 = vmatprep.subr.mxu0 0.0
        %912 = vmatpush1.msra.mxu0 0.0
        %913 = vmatprep.subr.mxu0 0.0
        %914 = vmatpush1.msra.mxu0 0.0
        %915 = vmatprep.subr.mxu0 0.0
        %916 = vmatpush1.msra.mxu0 0.0
        %917 = vmatprep.subr.mxu0 0.0
        %918 = vmatpush1.msra.mxu0 0.0
        %919 = vmatprep.subr.mxu0 0.0
        %920 = vmatpush1.msra.mxu0 0.0
        %921 = vmatprep.subr.mxu0 0.0
        %922 = vmatpush1.msra.mxu0 0.0
        %923 = vmatprep.subr.mxu0 0.0
        %924 = vmatpush1.msra.mxu0 0.0
        %925 = vmatprep.subr.mxu0 0.0
        %926 = vmatpush1.msra.mxu0 0.0
        %927 = vmatprep.subr.mxu0 0.0
        %928 = vmatpush1.msra.mxu0 0.0
        %929 = vmatprep.subr.mxu0 0.0
        %930 = vmatpush1.msra.mxu0 0.0
        %931 = vmatprep.subr.mxu0 0.0
        %932 = vmatpush1.msra.mxu0 0.0
        %933 = vmatprep.subr.mxu0 0.0
        %934 = vmatpush1.msra.mxu0 0.0
        %935 = vmatprep.subr.mxu0 0.0
        %936 = vmatpush1.msra.mxu0 0.0
        %937 = vmatprep.subr.mxu0 0.0
        %938 = vmatpush1.msra.mxu0 0.0
        %939 = vmatprep.subr.mxu0 0.0
        %940 = vmatpush1.msra.mxu0 0.0
        %941 = vmatprep.subr.mxu0 0.0
        %942 = vmatpush1.msra.mxu0 0.0
        %943 = vmatprep.subr.mxu0 0.0
        %944 = vmatpush1.msra.mxu0 0.0
        %945 = vmatprep.subr.mxu0 0.0
        %946 = vmatpush1.msra.mxu0 0.0
        %947 = vmatprep.subr.mxu0 0.0
        %948 = vmatpush1.msra.mxu0 0.0
        %949 = vmatprep.subr.mxu0 0.0
        %950 = vmatpush1.msra.mxu0 0.0
        %951 = vmatprep.subr.mxu0 0.0
        %952 = vmatpush1.msra.mxu0 0.0
        %953 = vmatprep.subr.mxu0 0.0
        %954 = vmatpush1.msra.mxu0 0.0
        %955 = vmatprep.subr.mxu0 0.0
        %956 = vmatpush1.msra.mxu0 0.0
        %957 = vmatprep.subr.mxu0 0.0
        %958 = vmatpush1.msra.mxu0 0.0
        %959 = vmatprep.subr.mxu0 0.0
        %960 = vmatpush1.msra.mxu0 0.0
        %961 = vmatprep.mubr.f32.mxu0 0.0
        %962 = vmatmul.mubr.f32.gmra.mrb[0].mxu0 %v439
        %v963 = vpop.f32.mrb[0].mxu0
        %v964 = vadd.f32 0.0, %v963
        %v965 = vpop.f32.mrb[0].mxu0
        %966 = vmatprep.mubr.f32.mxu0 0.0
        %967 = vmatmul.mubr.f32.gmra.mrb[0].mxu0 %v442
        %v968 = vpop.f32.mrb[0].mxu0
        %v969 = vadd.f32 0.0, %v968
        %v970 = vpop.f32.mrb[0].mxu0
        %971 = vmatprep.mubr.f32.mxu0 0.0
        %972 = vmatmul.mubr.f32.gmra.mrb[0].mxu0 %v445
        %v973 = vpop.f32.mrb[0].mxu0
        %v974 = vadd.f32 0.0, %v973
        %v975 = vpop.f32.mrb[0].mxu0
        %976 = vmatprep.mubr.f32.mxu0 0.0
        %977 = vmatmul.mubr.f32.gmra.mrb[0].mxu0 %v448
        %v978 = vpop.f32.mrb[0].mxu0
        %v979 = vadd.f32 0.0, %v978
        %v980 = vpop.f32.mrb[0].mxu0
        %981 = vmatprep.mubr.f32.mxu0 0.0
        %982 = vmatmul.mubr.f32.gmra.mrb[0].mxu0 %v451
        %v983 = vpop.f32.mrb[0].mxu0
        %v984 = vadd.f32 0.0, %v983
        %v985 = vpop.f32.mrb[0].mxu0
        %986 = vmatprep.mubr.f32.mxu0 0.0
        %987 = vmatmul.mubr.f32.gmra.mrb[0].mxu0 %v454
        %v988 = vpop.f32.mrb[0].mxu0
        %v989 = vadd.f32 0.0, %v988
        %v990 = vpop.f32.mrb[0].mxu0
        %991 = vmatprep.mubr.f32.mxu0 0.0
        %992 = vmatmul.mubr.f32.gmra.mrb[0].mxu0 %v457
        %v993 = vpop.f32.mrb[0].mxu0
        %v994 = vadd.f32 0.0, %v993
        %v995 = vpop.f32.mrb[0].mxu0
        %996 = vmatprep.mubr.f32.mxu0 0.0
        %997 = vmatmul.mubr.f32.gmra.mrb[0].mxu0 %v460
        %v998 = vpop.f32.mrb[0].mxu0
        %v999 = vadd.f32 0.0, %v998
        %v1000 = vpop.f32.mrb[0].mxu0
        %1001 = vdwg.mxu0
        %v1002 = vxor.u32 %v964, 2147483648
        %v1003 = vxor.u32 %v969, 2147483648
        %v1004 = vxor.u32 %v974, 2147483648
        %v1005 = vxor.u32 %v979, 2147483648
        %v1006 = vxor.u32 %v984, 2147483648
        %v1007 = vxor.u32 %v989, 2147483648
        %v1008 = vxor.u32 %v994, 2147483648
        %v1009 = vxor.u32 %v999, 2147483648
        %v1010 = vmul.f32 %v1002, 1.442695
        %v1011 = vpow.pop %v1010
        %v1012 = vmul.f32 %v1003, 1.442695
        %v1013 = vpow.pop %v1012
        %v1014 = vmul.f32 %v1004, 1.442695
        %v1015 = vpow.pop %v1014
        %v1016 = vmul.f32 %v1005, 1.442695
        %v1017 = vpow.pop %v1016
        %v1018 = vmul.f32 %v1006, 1.442695
        %v1019 = vpow.pop %v1018
        %v1020 = vmul.f32 %v1007, 1.442695
        %v1021 = vpow.pop %v1020
        %v1022 = vmul.f32 %v1008, 1.442695
        %v1023 = vpow.pop %v1022
        %v1024 = vmul.f32 %v1009, 1.442695
        %v1025 = vpow.pop %v1024
        %v1026 = vadd.f32 %v1011, 1.0
        %v1027 = vadd.f32 %v1013, 1.0
        %v1028 = vadd.f32 %v1015, 1.0
        %v1029 = vadd.f32 %v1017, 1.0
        %v1030 = vadd.f32 %v1019, 1.0
        %v1031 = vadd.f32 %v1021, 1.0
        %v1032 = vadd.f32 %v1023, 1.0
        %v1033 = vadd.f32 %v1025, 1.0
        %v1034 = vrcp.pop %v1026
        %v1035 = vmul.f32 1.0, %v1034
        %v1036 = vrcp.pop %v1027
        %v1037 = vmul.f32 1.0, %v1036
        %v1038 = vrcp.pop %v1028
        %v1039 = vmul.f32 1.0, %v1038
        %v1040 = vrcp.pop %v1029
        %v1041 = vmul.f32 1.0, %v1040
        %v1042 = vrcp.pop %v1030
        %v1043 = vmul.f32 1.0, %v1042
        %v1044 = vrcp.pop %v1031
        %v1045 = vmul.f32 1.0, %v1044
        %v1046 = vrcp.pop %v1032
        %v1047 = vmul.f32 1.0, %v1046
        %v1048 = vrcp.pop %v1033
        %v1049 = vmul.f32 1.0, %v1048
        %1051 = vset.pattern.permute.xlu0 0
        %1052 = vperm.xlu0 %1051, %v1035
        %v1053 = vpop.permute.xlu0 %1052
        %1056 = vset.pattern.permute.xlu0 0
        %1057 = vperm.xlu0 %1056, %v1037
        %v1058 = vpop.permute.xlu0 %1057
        %1061 = vset.pattern.permute.xlu0 0
        %1062 = vperm.xlu0 %1061, %v1039
        %v1063 = vpop.permute.xlu0 %1062
        %1066 = vset.pattern.permute.xlu0 0
        %1067 = vperm.xlu0 %1066, %v1041
        %v1068 = vpop.permute.xlu0 %1067
        %1071 = vset.pattern.permute.xlu0 0
        %1072 = vperm.xlu0 %1071, %v1043
        %v1073 = vpop.permute.xlu0 %1072
        %1076 = vset.pattern.permute.xlu0 0
        %1077 = vperm.xlu0 %1076, %v1045
        %v1078 = vpop.permute.xlu0 %1077
        %1081 = vset.pattern.permute.xlu0 0
        %1082 = vperm.xlu0 %1081, %v1047
        %v1083 = vpop.permute.xlu0 %1082
        %1086 = vset.pattern.permute.xlu0 0
        %1087 = vperm.xlu0 %1086, %v1049
        %v1088 = vpop.permute.xlu0 %1087
        %v1090 = vmul.f32 %v692, %v1053
        %v1091 = vmul.f32 %v693, %v1053
        %v1092 = vmul.f32 %v694, %v1058
        %v1093 = vmul.f32 %v695, %v1058
        %v1094 = vmul.f32 %v696, %v1063
        %v1095 = vmul.f32 %v697, %v1063
        %v1096 = vmul.f32 %v698, %v1068
        %v1097 = vmul.f32 %v699, %v1068
        %v1098 = vmul.f32 %v700, %v1073
        %v1099 = vmul.f32 %v701, %v1073
        %v1100 = vmul.f32 %v702, %v1078
        %v1101 = vmul.f32 %v703, %v1078
        %v1102 = vmul.f32 %v704, %v1083
        %v1103 = vmul.f32 %v705, %v1083
        %v1104 = vmul.f32 %v706, %v1088
        %v1105 = vmul.f32 %v707, %v1088
        %s1106 = scalar_lea.vmem %s217, 128 [#allocation6]
        %1107 = vst [vmem:[%s1106] sm:$0xff] %v1090
        %1108 = vst [vmem:[%s1106 + $0x8] sm:$0xff] %v1091
        %1109 = vst [vmem:[%s1106 + $0x10] sm:$0xff] %v1092
        %1110 = vst [vmem:[%s1106 + $0x18] sm:$0xff] %v1093
        %1111 = vst [vmem:[%s1106 + $0x20] sm:$0xff] %v1094
        %1112 = vst [vmem:[%s1106 + $0x28] sm:$0xff] %v1095
        %1113 = vst [vmem:[%s1106 + $0x30] sm:$0xff] %v1096
        %1114 = vst [vmem:[%s1106 + $0x38] sm:$0xff] %v1097
        %1115 = vst [vmem:[%s1106 + $0x40] sm:$0xff] %v1098
        %1116 = vst [vmem:[%s1106 + $0x48] sm:$0xff] %v1099
        %1117 = vst [vmem:[%s1106 + $0x50] sm:$0xff] %v1100
        %1118 = vst [vmem:[%s1106 + $0x58] sm:$0xff] %v1101
        %1119 = vst [vmem:[%s1106 + $0x60] sm:$0xff] %v1102
        %1120 = vst [vmem:[%s1106 + $0x68] sm:$0xff] %v1103
        %1121 = vst [vmem:[%s1106 + $0x70] sm:$0xff] %v1104
        %1122 = vst [vmem:[%s1106 + $0x78] sm:$0xff] %v1105
        %s1123 = scalar_lea.vmem %s193, 256 [#allocation3]
        %v1124 = vld [vmem:[%s1123] sm:$0xff]
        %v1125 = vld [vmem:[%s1123 + $0x8] sm:$0xff]
        %v1126 = vld [vmem:[%s1123 + $0x10] sm:$0xff]
        %v1127 = vld [vmem:[%s1123 + $0x18] sm:$0xff]
        %v1128 = vld [vmem:[%s1123 + $0x20] sm:$0xff]
        %v1129 = vld [vmem:[%s1123 + $0x28] sm:$0xff]
        %v1130 = vld [vmem:[%s1123 + $0x30] sm:$0xff]
        %v1131 = vld [vmem:[%s1123 + $0x38] sm:$0xff]
        %v1132 = vld [vmem:[%s1123 + $0x40] sm:$0xff]
        %v1133 = vld [vmem:[%s1123 + $0x48] sm:$0xff]
        %v1134 = vld [vmem:[%s1123 + $0x50] sm:$0xff]
        %v1135 = vld [vmem:[%s1123 + $0x58] sm:$0xff]
        %v1136 = vld [vmem:[%s1123 + $0x60] sm:$0xff]
        %v1137 = vld [vmem:[%s1123 + $0x68] sm:$0xff]
        %v1138 = vld [vmem:[%s1123 + $0x70] sm:$0xff]
        %v1139 = vld [vmem:[%s1123 + $0x78] sm:$0xff]
        %1140 = vmatprep.subr.mxu0 0.0
        %1141 = vmatpush1.msra.mxu0 1.0
        %1142 = vmatprep.subr.mxu0 0.0
        %1143 = vmatpush1.msra.mxu0 1.0
        %1144 = vmatprep.subr.mxu0 0.0
        %1145 = vmatpush1.msra.mxu0 1.0
        %1146 = vmatprep.subr.mxu0 0.0
        %1147 = vmatpush1.msra.mxu0 1.0
        %1148 = vmatprep.subr.mxu0 0.0
        %1149 = vmatpush1.msra.mxu0 1.0
        %1150 = vmatprep.subr.mxu0 0.0
        %1151 = vmatpush1.msra.mxu0 1.0
        %1152 = vmatprep.subr.mxu0 0.0
        %1153 = vmatpush1.msra.mxu0 1.0
        %1154 = vmatprep.subr.mxu0 0.0
        %1155 = vmatpush1.msra.mxu0 1.0
        %1156 = vmatprep.subr.mxu0 0.0
        %1157 = vmatpush1.msra.mxu0 1.0
        %1158 = vmatprep.subr.mxu0 0.0
        %1159 = vmatpush1.msra.mxu0 1.0
        %1160 = vmatprep.subr.mxu0 0.0
        %1161 = vmatpush1.msra.mxu0 1.0
        %1162 = vmatprep.subr.mxu0 0.0
        %1163 = vmatpush1.msra.mxu0 1.0
        %1164 = vmatprep.subr.mxu0 0.0
        %1165 = vmatpush1.msra.mxu0 1.0
        %1166 = vmatprep.subr.mxu0 0.0
        %1167 = vmatpush1.msra.mxu0 1.0
        %1168 = vmatprep.subr.mxu0 0.0
        %1169 = vmatpush1.msra.mxu0 1.0
        %1170 = vmatprep.subr.mxu0 0.0
        %1171 = vmatpush1.msra.mxu0 1.0
        %1172 = vmatprep.subr.mxu0 0.0
        %1173 = vmatpush1.msra.mxu0 1.0
        %1174 = vmatprep.subr.mxu0 0.0
        %1175 = vmatpush1.msra.mxu0 1.0
        %1176 = vmatprep.subr.mxu0 0.0
        %1177 = vmatpush1.msra.mxu0 1.0
        %1178 = vmatprep.subr.mxu0 0.0
        %1179 = vmatpush1.msra.mxu0 1.0
        %1180 = vmatprep.subr.mxu0 0.0
        %1181 = vmatpush1.msra.mxu0 1.0
        %1182 = vmatprep.subr.mxu0 0.0
        %1183 = vmatpush1.msra.mxu0 1.0
        %1184 = vmatprep.subr.mxu0 0.0
        %1185 = vmatpush1.msra.mxu0 1.0
        %1186 = vmatprep.subr.mxu0 0.0
        %1187 = vmatpush1.msra.mxu0 1.0
        %1188 = vmatprep.subr.mxu0 0.0
        %1189 = vmatpush1.msra.mxu0 1.0
        %1190 = vmatprep.subr.mxu0 0.0
        %1191 = vmatpush1.msra.mxu0 1.0
        %1192 = vmatprep.subr.mxu0 0.0
        %1193 = vmatpush1.msra.mxu0 1.0
        %1194 = vmatprep.subr.mxu0 0.0
        %1195 = vmatpush1.msra.mxu0 1.0
        %1196 = vmatprep.subr.mxu0 0.0
        %1197 = vmatpush1.msra.mxu0 1.0
        %1198 = vmatprep.subr.mxu0 0.0
        %1199 = vmatpush1.msra.mxu0 1.0
        %1200 = vmatprep.subr.mxu0 0.0
        %1201 = vmatpush1.msra.mxu0 1.0
        %1202 = vmatprep.subr.mxu0 0.0
        %1203 = vmatpush1.msra.mxu0 1.0
        %1204 = vmatprep.mubr.f32.mxu0 %v1125
        %1205 = vmatmul.mubr.f32.gmra.mrb[0].mxu0 %v1124
        %v1206 = vpop.f32.mrb[0].mxu0
        %v1207 = vadd.f32 0.0, %v1206
        %v1208 = vpop.f32.mrb[0].mxu0
        %1209 = vmatprep.mubr.f32.mxu0 %v1127
        %1210 = vmatmul.mubr.f32.gmra.mrb[0].mxu0 %v1126
        %v1211 = vpop.f32.mrb[0].mxu0
        %v1212 = vadd.f32 0.0, %v1211
        %v1213 = vpop.f32.mrb[0].mxu0
        %1214 = vmatprep.mubr.f32.mxu0 %v1129
        %1215 = vmatmul.mubr.f32.gmra.mrb[0].mxu0 %v1128
        %v1216 = vpop.f32.mrb[0].mxu0
        %v1217 = vadd.f32 0.0, %v1216
        %v1218 = vpop.f32.mrb[0].mxu0
        %1219 = vmatprep.mubr.f32.mxu0 %v1131
        %1220 = vmatmul.mubr.f32.gmra.mrb[0].mxu0 %v1130
        %v1221 = vpop.f32.mrb[0].mxu0
        %v1222 = vadd.f32 0.0, %v1221
        %v1223 = vpop.f32.mrb[0].mxu0
        %1224 = vmatprep.mubr.f32.mxu0 %v1133
        %1225 = vmatmul.mubr.f32.gmra.mrb[0].mxu0 %v1132
        %v1226 = vpop.f32.mrb[0].mxu0
        %v1227 = vadd.f32 0.0, %v1226
        %v1228 = vpop.f32.mrb[0].mxu0
        %1229 = vmatprep.mubr.f32.mxu0 %v1135
        %1230 = vmatmul.mubr.f32.gmra.mrb[0].mxu0 %v1134
        %v1231 = vpop.f32.mrb[0].mxu0
        %v1232 = vadd.f32 0.0, %v1231
        %v1233 = vpop.f32.mrb[0].mxu0
        %1234 = vmatprep.mubr.f32.mxu0 %v1137
        %1235 = vmatmul.mubr.f32.gmra.mrb[0].mxu0 %v1136
        %v1236 = vpop.f32.mrb[0].mxu0
        %v1237 = vadd.f32 0.0, %v1236
        %v1238 = vpop.f32.mrb[0].mxu0
        %1239 = vmatprep.mubr.f32.mxu0 %v1139
        %1240 = vmatmul.mubr.f32.gmra.mrb[0].mxu0 %v1138
        %v1241 = vpop.f32.mrb[0].mxu0
        %v1242 = vadd.f32 0.0, %v1241
        %v1243 = vpop.f32.mrb[0].mxu0
        %1244 = vdwg.mxu0
        %v1245 = vmul.f32 %v1207, 0.00390625
        %v1246 = vmul.f32 %v1212, 0.00390625
        %v1247 = vmul.f32 %v1217, 0.00390625
        %v1248 = vmul.f32 %v1222, 0.00390625
        %v1249 = vmul.f32 %v1227, 0.00390625
        %v1250 = vmul.f32 %v1232, 0.00390625
        %v1251 = vmul.f32 %v1237, 0.00390625
        %v1252 = vmul.f32 %v1242, 0.00390625
        %1253 = vmatprep.subr.mxu0 0.0
        %1254 = vmatpush1.msra.mxu0 %v1245
        %1255 = vmatprep.subr.mxu0 0.0
        %1256 = vmatpush1.msra.mxu0 %v1246
        %1257 = vmatprep.subr.mxu0 0.0
        %1258 = vmatpush1.msra.mxu0 %v1247
        %1259 = vmatprep.subr.mxu0 0.0
        %1260 = vmatpush1.msra.mxu0 %v1248
        %1261 = vmatprep.subr.mxu0 0.0
        %1262 = vmatpush1.msra.mxu0 %v1249
        %1263 = vmatprep.subr.mxu0 0.0
        %1264 = vmatpush1.msra.mxu0 %v1250
        %1265 = vmatprep.subr.mxu0 0.0
        %1266 = vmatpush1.msra.mxu0 %v1251
        %1267 = vmatprep.subr.mxu0 0.0
        %1268 = vmatpush1.msra.mxu0 %v1252
        %1269 = vmatprep.subr.mxu0 0.0
        %1270 = vmatpush1.msra.mxu0 0.0
        %1271 = vmatprep.subr.mxu0 0.0
        %1272 = vmatpush1.msra.mxu0 0.0
        %1273 = vmatprep.subr.mxu0 0.0
        %1274 = vmatpush1.msra.mxu0 0.0
        %1275 = vmatprep.subr.mxu0 0.0
        %1276 = vmatpush1.msra.mxu0 0.0
        %1277 = vmatprep.subr.mxu0 0.0
        %1278 = vmatpush1.msra.mxu0 0.0
        %1279 = vmatprep.subr.mxu0 0.0
        %1280 = vmatpush1.msra.mxu0 0.0
        %1281 = vmatprep.subr.mxu0 0.0
        %1282 = vmatpush1.msra.mxu0 0.0
        %1283 = vmatprep.subr.mxu0 0.0
        %1284 = vmatpush1.msra.mxu0 0.0
        %1285 = vmatprep.subr.mxu0 0.0
        %1286 = vmatpush1.msra.mxu0 0.0
        %1287 = vmatprep.subr.mxu0 0.0
        %1288 = vmatpush1.msra.mxu0 0.0
        %1289 = vmatprep.subr.mxu0 0.0
        %1290 = vmatpush1.msra.mxu0 0.0
        %1291 = vmatprep.subr.mxu0 0.0
        %1292 = vmatpush1.msra.mxu0 0.0
        %1293 = vmatprep.subr.mxu0 0.0
        %1294 = vmatpush1.msra.mxu0 0.0
        %1295 = vmatprep.subr.mxu0 0.0
        %1296 = vmatpush1.msra.mxu0 0.0
        %1297 = vmatprep.subr.mxu0 0.0
        %1298 = vmatpush1.msra.mxu0 0.0
        %1299 = vmatprep.subr.mxu0 0.0
        %1300 = vmatpush1.msra.mxu0 0.0
        %1301 = vmatprep.subr.mxu0 0.0
        %1302 = vmatpush1.msra.mxu0 0.0
        %1303 = vmatprep.subr.mxu0 0.0
        %1304 = vmatpush1.msra.mxu0 0.0
        %1305 = vmatprep.subr.mxu0 0.0
        %1306 = vmatpush1.msra.mxu0 0.0
        %1307 = vmatprep.subr.mxu0 0.0
        %1308 = vmatpush1.msra.mxu0 0.0
        %1309 = vmatprep.subr.mxu0 0.0
        %1310 = vmatpush1.msra.mxu0 0.0
        %1311 = vmatprep.subr.mxu0 0.0
        %1312 = vmatpush1.msra.mxu0 0.0
        %1313 = vmatprep.subr.mxu0 0.0
        %1314 = vmatpush1.msra.mxu0 0.0
        %1315 = vmatprep.subr.mxu0 0.0
        %1316 = vmatpush1.msra.mxu0 0.0
        %1317 = vmatprep.mubr.f32.mxu0 0.0
        %1318 = vmatmul.mubr.f32.gmra.mrb[0].mxu0 %v361
        %v1319 = vpop.f32.mrb[0].mxu0
        %v1320 = vadd.f32 0.0, %v1319
        %v1321 = vpop.f32.mrb[0].mxu0
        %1322 = vdwg.mxu0
        %vm1323 = vcmp.ge.f32.partialorder %v1320, 0.0
        %v1324 = vmul.f32 %v434, %v1320
        %v1325 = vsel %vm1323, %v1320, %v1324
        %v1327 = vsel %vm462, %v1325, 0
        %1329 = vmatprep.subr.mxu0 0.0
        %1330 = vmatpush1.msra.mxu0 %v1327
        %1331 = vmatprep.subr.mxu0 0.0
        %1332 = vmatpush1.msra.mxu0 0.0
        %1333 = vmatprep.subr.mxu0 0.0
        %1334 = vmatpush1.msra.mxu0 0.0
        %1335 = vmatprep.subr.mxu0 0.0
        %1336 = vmatpush1.msra.mxu0 0.0
        %1337 = vmatprep.subr.mxu0 0.0
        %1338 = vmatpush1.msra.mxu0 0.0
        %1339 = vmatprep.subr.mxu0 0.0
        %1340 = vmatpush1.msra.mxu0 0.0
        %1341 = vmatprep.subr.mxu0 0.0
        %1342 = vmatpush1.msra.mxu0 0.0
        %1343 = vmatprep.subr.mxu0 0.0
        %1344 = vmatpush1.msra.mxu0 0.0
        %1345 = vmatprep.subr.mxu0 0.0
        %1346 = vmatpush1.msra.mxu0 0.0
        %1347 = vmatprep.subr.mxu0 0.0
        %1348 = vmatpush1.msra.mxu0 0.0
        %1349 = vmatprep.subr.mxu0 0.0
        %1350 = vmatpush1.msra.mxu0 0.0
        %1351 = vmatprep.subr.mxu0 0.0
        %1352 = vmatpush1.msra.mxu0 0.0
        %1353 = vmatprep.subr.mxu0 0.0
        %1354 = vmatpush1.msra.mxu0 0.0
        %1355 = vmatprep.subr.mxu0 0.0
        %1356 = vmatpush1.msra.mxu0 0.0
        %1357 = vmatprep.subr.mxu0 0.0
        %1358 = vmatpush1.msra.mxu0 0.0
        %1359 = vmatprep.subr.mxu0 0.0
        %1360 = vmatpush1.msra.mxu0 0.0
        %1361 = vmatprep.subr.mxu0 0.0
        %1362 = vmatpush1.msra.mxu0 0.0
        %1363 = vmatprep.subr.mxu0 0.0
        %1364 = vmatpush1.msra.mxu0 0.0
        %1365 = vmatprep.subr.mxu0 0.0
        %1366 = vmatpush1.msra.mxu0 0.0
        %1367 = vmatprep.subr.mxu0 0.0
        %1368 = vmatpush1.msra.mxu0 0.0
        %1369 = vmatprep.subr.mxu0 0.0
        %1370 = vmatpush1.msra.mxu0 0.0
        %1371 = vmatprep.subr.mxu0 0.0
        %1372 = vmatpush1.msra.mxu0 0.0
        %1373 = vmatprep.subr.mxu0 0.0
        %1374 = vmatpush1.msra.mxu0 0.0
        %1375 = vmatprep.subr.mxu0 0.0
        %1376 = vmatpush1.msra.mxu0 0.0
        %1377 = vmatprep.subr.mxu0 0.0
        %1378 = vmatpush1.msra.mxu0 0.0
        %1379 = vmatprep.subr.mxu0 0.0
        %1380 = vmatpush1.msra.mxu0 0.0
        %1381 = vmatprep.subr.mxu0 0.0
        %1382 = vmatpush1.msra.mxu0 0.0
        %1383 = vmatprep.subr.mxu0 0.0
        %1384 = vmatpush1.msra.mxu0 0.0
        %1385 = vmatprep.subr.mxu0 0.0
        %1386 = vmatpush1.msra.mxu0 0.0
        %1387 = vmatprep.subr.mxu0 0.0
        %1388 = vmatpush1.msra.mxu0 0.0
        %1389 = vmatprep.subr.mxu0 0.0
        %1390 = vmatpush1.msra.mxu0 0.0
        %1391 = vmatprep.subr.mxu0 0.0
        %1392 = vmatpush1.msra.mxu0 0.0
        %1393 = vmatprep.mubr.f32.mxu0 0.0
        %1394 = vmatmul.mubr.f32.gmra.mrb[0].mxu0 %v439
        %v1395 = vpop.f32.mrb[0].mxu0
        %v1396 = vadd.f32 0.0, %v1395
        %v1397 = vpop.f32.mrb[0].mxu0
        %1398 = vmatprep.mubr.f32.mxu0 0.0
        %1399 = vmatmul.mubr.f32.gmra.mrb[0].mxu0 %v442
        %v1400 = vpop.f32.mrb[0].mxu0
        %v1401 = vadd.f32 0.0, %v1400
        %v1402 = vpop.f32.mrb[0].mxu0
        %1403 = vmatprep.mubr.f32.mxu0 0.0
        %1404 = vmatmul.mubr.f32.gmra.mrb[0].mxu0 %v445
        %v1405 = vpop.f32.mrb[0].mxu0
        %v1406 = vadd.f32 0.0, %v1405
        %v1407 = vpop.f32.mrb[0].mxu0
        %1408 = vmatprep.mubr.f32.mxu0 0.0
        %1409 = vmatmul.mubr.f32.gmra.mrb[0].mxu0 %v448
        %v1410 = vpop.f32.mrb[0].mxu0
        %v1411 = vadd.f32 0.0, %v1410
        %v1412 = vpop.f32.mrb[0].mxu0
        %1413 = vmatprep.mubr.f32.mxu0 0.0
        %1414 = vmatmul.mubr.f32.gmra.mrb[0].mxu0 %v451
        %v1415 = vpop.f32.mrb[0].mxu0
        %v1416 = vadd.f32 0.0, %v1415
        %v1417 = vpop.f32.mrb[0].mxu0
        %1418 = vmatprep.mubr.f32.mxu0 0.0
        %1419 = vmatmul.mubr.f32.gmra.mrb[0].mxu0 %v454
        %v1420 = vpop.f32.mrb[0].mxu0
        %v1421 = vadd.f32 0.0, %v1420
        %v1422 = vpop.f32.mrb[0].mxu0
        %1423 = vmatprep.mubr.f32.mxu0 0.0
        %1424 = vmatmul.mubr.f32.gmra.mrb[0].mxu0 %v457
        %v1425 = vpop.f32.mrb[0].mxu0
        %v1426 = vadd.f32 0.0, %v1425
        %v1427 = vpop.f32.mrb[0].mxu0
        %1428 = vmatprep.mubr.f32.mxu0 0.0
        %1429 = vmatmul.mubr.f32.gmra.mrb[0].mxu0 %v460
        %v1430 = vpop.f32.mrb[0].mxu0
        %v1431 = vadd.f32 0.0, %v1430
        %v1432 = vpop.f32.mrb[0].mxu0
        %1433 = vdwg.mxu0
        %v1434 = vxor.u32 %v1396, 2147483648
        %v1435 = vxor.u32 %v1401, 2147483648
        %v1436 = vxor.u32 %v1406, 2147483648
        %v1437 = vxor.u32 %v1411, 2147483648
        %v1438 = vxor.u32 %v1416, 2147483648
        %v1439 = vxor.u32 %v1421, 2147483648
        %v1440 = vxor.u32 %v1426, 2147483648
        %v1441 = vxor.u32 %v1431, 2147483648
        %v1442 = vmul.f32 %v1434, 1.442695
        %v1443 = vpow.pop %v1442
        %v1444 = vmul.f32 %v1435, 1.442695
        %v1445 = vpow.pop %v1444
        %v1446 = vmul.f32 %v1436, 1.442695
        %v1447 = vpow.pop %v1446
        %v1448 = vmul.f32 %v1437, 1.442695
        %v1449 = vpow.pop %v1448
        %v1450 = vmul.f32 %v1438, 1.442695
        %v1451 = vpow.pop %v1450
        %v1452 = vmul.f32 %v1439, 1.442695
        %v1453 = vpow.pop %v1452
        %v1454 = vmul.f32 %v1440, 1.442695
        %v1455 = vpow.pop %v1454
        %v1456 = vmul.f32 %v1441, 1.442695
        %v1457 = vpow.pop %v1456
        %v1458 = vadd.f32 %v1443, 1.0
        %v1459 = vadd.f32 %v1445, 1.0
        %v1460 = vadd.f32 %v1447, 1.0
        %v1461 = vadd.f32 %v1449, 1.0
        %v1462 = vadd.f32 %v1451, 1.0
        %v1463 = vadd.f32 %v1453, 1.0
        %v1464 = vadd.f32 %v1455, 1.0
        %v1465 = vadd.f32 %v1457, 1.0
        %v1466 = vrcp.pop %v1458
        %v1467 = vmul.f32 1.0, %v1466
        %v1468 = vrcp.pop %v1459
        %v1469 = vmul.f32 1.0, %v1468
        %v1470 = vrcp.pop %v1460
        %v1471 = vmul.f32 1.0, %v1470
        %v1472 = vrcp.pop %v1461
        %v1473 = vmul.f32 1.0, %v1472
        %v1474 = vrcp.pop %v1462
        %v1475 = vmul.f32 1.0, %v1474
        %v1476 = vrcp.pop %v1463
        %v1477 = vmul.f32 1.0, %v1476
        %v1478 = vrcp.pop %v1464
        %v1479 = vmul.f32 1.0, %v1478
        %v1480 = vrcp.pop %v1465
        %v1481 = vmul.f32 1.0, %v1480
        %1483 = vset.pattern.permute.xlu0 0
        %1484 = vperm.xlu0 %1483, %v1467
        %v1485 = vpop.permute.xlu0 %1484
        %1488 = vset.pattern.permute.xlu0 0
        %1489 = vperm.xlu0 %1488, %v1469
        %v1490 = vpop.permute.xlu0 %1489
        %1493 = vset.pattern.permute.xlu0 0
        %1494 = vperm.xlu0 %1493, %v1471
        %v1495 = vpop.permute.xlu0 %1494
        %1498 = vset.pattern.permute.xlu0 0
        %1499 = vperm.xlu0 %1498, %v1473
        %v1500 = vpop.permute.xlu0 %1499
        %1503 = vset.pattern.permute.xlu0 0
        %1504 = vperm.xlu0 %1503, %v1475
        %v1505 = vpop.permute.xlu0 %1504
        %1508 = vset.pattern.permute.xlu0 0
        %1509 = vperm.xlu0 %1508, %v1477
        %v1510 = vpop.permute.xlu0 %1509
        %1513 = vset.pattern.permute.xlu0 0
        %1514 = vperm.xlu0 %1513, %v1479
        %v1515 = vpop.permute.xlu0 %1514
        %1518 = vset.pattern.permute.xlu0 0
        %1519 = vperm.xlu0 %1518, %v1481
        %v1520 = vpop.permute.xlu0 %1519
        %v1522 = vmul.f32 %v1124, %v1485
        %v1523 = vmul.f32 %v1125, %v1485
        %v1524 = vmul.f32 %v1126, %v1490
        %v1525 = vmul.f32 %v1127, %v1490
        %v1526 = vmul.f32 %v1128, %v1495
        %v1527 = vmul.f32 %v1129, %v1495
        %v1528 = vmul.f32 %v1130, %v1500
        %v1529 = vmul.f32 %v1131, %v1500
        %v1530 = vmul.f32 %v1132, %v1505
        %v1531 = vmul.f32 %v1133, %v1505
        %v1532 = vmul.f32 %v1134, %v1510
        %v1533 = vmul.f32 %v1135, %v1510
        %v1534 = vmul.f32 %v1136, %v1515
        %v1535 = vmul.f32 %v1137, %v1515
        %v1536 = vmul.f32 %v1138, %v1520
        %v1537 = vmul.f32 %v1139, %v1520
        %s1538 = scalar_lea.vmem %s217, 256 [#allocation6]
        %1539 = vst [vmem:[%s1538] sm:$0xff] %v1522
        %1540 = vst [vmem:[%s1538 + $0x8] sm:$0xff] %v1523
        %1541 = vst [vmem:[%s1538 + $0x10] sm:$0xff] %v1524
        %1542 = vst [vmem:[%s1538 + $0x18] sm:$0xff] %v1525
        %1543 = vst [vmem:[%s1538 + $0x20] sm:$0xff] %v1526
        %1544 = vst [vmem:[%s1538 + $0x28] sm:$0xff] %v1527
        %1545 = vst [vmem:[%s1538 + $0x30] sm:$0xff] %v1528
        %1546 = vst [vmem:[%s1538 + $0x38] sm:$0xff] %v1529
        %1547 = vst [vmem:[%s1538 + $0x40] sm:$0xff] %v1530
        %1548 = vst [vmem:[%s1538 + $0x48] sm:$0xff] %v1531
        %1549 = vst [vmem:[%s1538 + $0x50] sm:$0xff] %v1532
        %1550 = vst [vmem:[%s1538 + $0x58] sm:$0xff] %v1533
        %1551 = vst [vmem:[%s1538 + $0x60] sm:$0xff] %v1534
        %1552 = vst [vmem:[%s1538 + $0x68] sm:$0xff] %v1535
        %1553 = vst [vmem:[%s1538 + $0x70] sm:$0xff] %v1536
        %1554 = vst [vmem:[%s1538 + $0x78] sm:$0xff] %v1537
        %s1555 = scalar_lea.vmem %s193, 384 [#allocation3]
        %v1556 = vld [vmem:[%s1555] sm:$0xff]
        %v1557 = vld [vmem:[%s1555 + $0x8] sm:$0xff]
        %v1558 = vld [vmem:[%s1555 + $0x10] sm:$0xff]
        %v1559 = vld [vmem:[%s1555 + $0x18] sm:$0xff]
        %v1560 = vld [vmem:[%s1555 + $0x20] sm:$0xff]
        %v1561 = vld [vmem:[%s1555 + $0x28] sm:$0xff]
        %v1562 = vld [vmem:[%s1555 + $0x30] sm:$0xff]
        %v1563 = vld [vmem:[%s1555 + $0x38] sm:$0xff]
        %v1564 = vld [vmem:[%s1555 + $0x40] sm:$0xff]
        %v1565 = vld [vmem:[%s1555 + $0x48] sm:$0xff]
        %v1566 = vld [vmem:[%s1555 + $0x50] sm:$0xff]
        %v1567 = vld [vmem:[%s1555 + $0x58] sm:$0xff]
        %v1568 = vld [vmem:[%s1555 + $0x60] sm:$0xff]
        %v1569 = vld [vmem:[%s1555 + $0x68] sm:$0xff]
        %v1570 = vld [vmem:[%s1555 + $0x70] sm:$0xff]
        %v1571 = vld [vmem:[%s1555 + $0x78] sm:$0xff]
        %1572 = vmatprep.subr.mxu0 0.0
        %1573 = vmatpush1.msra.mxu0 1.0
        %1574 = vmatprep.subr.mxu0 0.0
        %1575 = vmatpush1.msra.mxu0 1.0
        %1576 = vmatprep.subr.mxu0 0.0
        %1577 = vmatpush1.msra.mxu0 1.0
        %1578 = vmatprep.subr.mxu0 0.0
        %1579 = vmatpush1.msra.mxu0 1.0
        %1580 = vmatprep.subr.mxu0 0.0
        %1581 = vmatpush1.msra.mxu0 1.0
        %1582 = vmatprep.subr.mxu0 0.0
        %1583 = vmatpush1.msra.mxu0 1.0
        %1584 = vmatprep.subr.mxu0 0.0
        %1585 = vmatpush1.msra.mxu0 1.0
        %1586 = vmatprep.subr.mxu0 0.0
        %1587 = vmatpush1.msra.mxu0 1.0
        %1588 = vmatprep.subr.mxu0 0.0
        %1589 = vmatpush1.msra.mxu0 1.0
        %1590 = vmatprep.subr.mxu0 0.0
        %1591 = vmatpush1.msra.mxu0 1.0
        %1592 = vmatprep.subr.mxu0 0.0
        %1593 = vmatpush1.msra.mxu0 1.0
        %1594 = vmatprep.subr.mxu0 0.0
        %1595 = vmatpush1.msra.mxu0 1.0
        %1596 = vmatprep.subr.mxu0 0.0
        %1597 = vmatpush1.msra.mxu0 1.0
        %1598 = vmatprep.subr.mxu0 0.0
        %1599 = vmatpush1.msra.mxu0 1.0
        %1600 = vmatprep.subr.mxu0 0.0
        %1601 = vmatpush1.msra.mxu0 1.0
        %1602 = vmatprep.subr.mxu0 0.0
        %1603 = vmatpush1.msra.mxu0 1.0
        %1604 = vmatprep.subr.mxu0 0.0
        %1605 = vmatpush1.msra.mxu0 1.0
        %1606 = vmatprep.subr.mxu0 0.0
        %1607 = vmatpush1.msra.mxu0 1.0
        %1608 = vmatprep.subr.mxu0 0.0
        %1609 = vmatpush1.msra.mxu0 1.0
        %1610 = vmatprep.subr.mxu0 0.0
        %1611 = vmatpush1.msra.mxu0 1.0
        %1612 = vmatprep.subr.mxu0 0.0
        %1613 = vmatpush1.msra.mxu0 1.0
        %1614 = vmatprep.subr.mxu0 0.0
        %1615 = vmatpush1.msra.mxu0 1.0
        %1616 = vmatprep.subr.mxu0 0.0
        %1617 = vmatpush1.msra.mxu0 1.0
        %1618 = vmatprep.subr.mxu0 0.0
        %1619 = vmatpush1.msra.mxu0 1.0
        %1620 = vmatprep.subr.mxu0 0.0
        %1621 = vmatpush1.msra.mxu0 1.0
        %1622 = vmatprep.subr.mxu0 0.0
        %1623 = vmatpush1.msra.mxu0 1.0
        %1624 = vmatprep.subr.mxu0 0.0
        %1625 = vmatpush1.msra.mxu0 1.0
        %1626 = vmatprep.subr.mxu0 0.0
        %1627 = vmatpush1.msra.mxu0 1.0
        %1628 = vmatprep.subr.mxu0 0.0
        %1629 = vmatpush1.msra.mxu0 1.0
        %1630 = vmatprep.subr.mxu0 0.0
        %1631 = vmatpush1.msra.mxu0 1.0
        %1632 = vmatprep.subr.mxu0 0.0
        %1633 = vmatpush1.msra.mxu0 1.0
        %1634 = vmatprep.subr.mxu0 0.0
        %1635 = vmatpush1.msra.mxu0 1.0
        %1636 = vmatprep.mubr.f32.mxu0 %v1557
        %1637 = vmatmul.mubr.f32.gmra.mrb[0].mxu0 %v1556
        %v1638 = vpop.f32.mrb[0].mxu0
        %v1639 = vadd.f32 0.0, %v1638
        %v1640 = vpop.f32.mrb[0].mxu0
        %1641 = vmatprep.mubr.f32.mxu0 %v1559
        %1642 = vmatmul.mubr.f32.gmra.mrb[0].mxu0 %v1558
        %v1643 = vpop.f32.mrb[0].mxu0
        %v1644 = vadd.f32 0.0, %v1643
        %v1645 = vpop.f32.mrb[0].mxu0
        %1646 = vmatprep.mubr.f32.mxu0 %v1561
        %1647 = vmatmul.mubr.f32.gmra.mrb[0].mxu0 %v1560
        %v1648 = vpop.f32.mrb[0].mxu0
        %v1649 = vadd.f32 0.0, %v1648
        %v1650 = vpop.f32.mrb[0].mxu0
        %1651 = vmatprep.mubr.f32.mxu0 %v1563
        %1652 = vmatmul.mubr.f32.gmra.mrb[0].mxu0 %v1562
        %v1653 = vpop.f32.mrb[0].mxu0
        %v1654 = vadd.f32 0.0, %v1653
        %v1655 = vpop.f32.mrb[0].mxu0
        %1656 = vmatprep.mubr.f32.mxu0 %v1565
        %1657 = vmatmul.mubr.f32.gmra.mrb[0].mxu0 %v1564
        %v1658 = vpop.f32.mrb[0].mxu0
        %v1659 = vadd.f32 0.0, %v1658
        %v1660 = vpop.f32.mrb[0].mxu0
        %1661 = vmatprep.mubr.f32.mxu0 %v1567
        %1662 = vmatmul.mubr.f32.gmra.mrb[0].mxu0 %v1566
        %v1663 = vpop.f32.mrb[0].mxu0
        %v1664 = vadd.f32 0.0, %v1663
        %v1665 = vpop.f32.mrb[0].mxu0
        %1666 = vmatprep.mubr.f32.mxu0 %v1569
        %1667 = vmatmul.mubr.f32.gmra.mrb[0].mxu0 %v1568
        %v1668 = vpop.f32.mrb[0].mxu0
        %v1669 = vadd.f32 0.0, %v1668
        %v1670 = vpop.f32.mrb[0].mxu0
        %1671 = vmatprep.mubr.f32.mxu0 %v1571
        %1672 = vmatmul.mubr.f32.gmra.mrb[0].mxu0 %v1570
        %v1673 = vpop.f32.mrb[0].mxu0
        %v1674 = vadd.f32 0.0, %v1673
        %v1675 = vpop.f32.mrb[0].mxu0
        %1676 = vdwg.mxu0
        %v1677 = vmul.f32 %v1639, 0.00390625
        %v1678 = vmul.f32 %v1644, 0.00390625
        %v1679 = vmul.f32 %v1649, 0.00390625
        %v1680 = vmul.f32 %v1654, 0.00390625
        %v1681 = vmul.f32 %v1659, 0.00390625
        %v1682 = vmul.f32 %v1664, 0.00390625
        %v1683 = vmul.f32 %v1669, 0.00390625
        %v1684 = vmul.f32 %v1674, 0.00390625
        %1685 = vmatprep.subr.mxu0 0.0
        %1686 = vmatpush1.msra.mxu0 %v1677
        %1687 = vmatprep.subr.mxu0 0.0
        %1688 = vmatpush1.msra.mxu0 %v1678
        %1689 = vmatprep.subr.mxu0 0.0
        %1690 = vmatpush1.msra.mxu0 %v1679
        %1691 = vmatprep.subr.mxu0 0.0
        %1692 = vmatpush1.msra.mxu0 %v1680
        %1693 = vmatprep.subr.mxu0 0.0
        %1694 = vmatpush1.msra.mxu0 %v1681
        %1695 = vmatprep.subr.mxu0 0.0
        %1696 = vmatpush1.msra.mxu0 %v1682
        %1697 = vmatprep.subr.mxu0 0.0
        %1698 = vmatpush1.msra.mxu0 %v1683
        %1699 = vmatprep.subr.mxu0 0.0
        %1700 = vmatpush1.msra.mxu0 %v1684
        %1701 = vmatprep.subr.mxu0 0.0
        %1702 = vmatpush1.msra.mxu0 0.0
        %1703 = vmatprep.subr.mxu0 0.0
        %1704 = vmatpush1.msra.mxu0 0.0
        %1705 = vmatprep.subr.mxu0 0.0
        %1706 = vmatpush1.msra.mxu0 0.0
        %1707 = vmatprep.subr.mxu0 0.0
        %1708 = vmatpush1.msra.mxu0 0.0
        %1709 = vmatprep.subr.mxu0 0.0
        %1710 = vmatpush1.msra.mxu0 0.0
        %1711 = vmatprep.subr.mxu0 0.0
        %1712 = vmatpush1.msra.mxu0 0.0
        %1713 = vmatprep.subr.mxu0 0.0
        %1714 = vmatpush1.msra.mxu0 0.0
        %1715 = vmatprep.subr.mxu0 0.0
        %1716 = vmatpush1.msra.mxu0 0.0
        %1717 = vmatprep.subr.mxu0 0.0
        %1718 = vmatpush1.msra.mxu0 0.0
        %1719 = vmatprep.subr.mxu0 0.0
        %1720 = vmatpush1.msra.mxu0 0.0
        %1721 = vmatprep.subr.mxu0 0.0
        %1722 = vmatpush1.msra.mxu0 0.0
        %1723 = vmatprep.subr.mxu0 0.0
        %1724 = vmatpush1.msra.mxu0 0.0
        %1725 = vmatprep.subr.mxu0 0.0
        %1726 = vmatpush1.msra.mxu0 0.0
        %1727 = vmatprep.subr.mxu0 0.0
        %1728 = vmatpush1.msra.mxu0 0.0
        %1729 = vmatprep.subr.mxu0 0.0
        %1730 = vmatpush1.msra.mxu0 0.0
        %1731 = vmatprep.subr.mxu0 0.0
        %1732 = vmatpush1.msra.mxu0 0.0
        %1733 = vmatprep.subr.mxu0 0.0
        %1734 = vmatpush1.msra.mxu0 0.0
        %1735 = vmatprep.subr.mxu0 0.0
        %1736 = vmatpush1.msra.mxu0 0.0
        %1737 = vmatprep.subr.mxu0 0.0
        %1738 = vmatpush1.msra.mxu0 0.0
        %1739 = vmatprep.subr.mxu0 0.0
        %1740 = vmatpush1.msra.mxu0 0.0
        %1741 = vmatprep.subr.mxu0 0.0
        %1742 = vmatpush1.msra.mxu0 0.0
        %1743 = vmatprep.subr.mxu0 0.0
        %1744 = vmatpush1.msra.mxu0 0.0
        %1745 = vmatprep.subr.mxu0 0.0
        %1746 = vmatpush1.msra.mxu0 0.0
        %1747 = vmatprep.subr.mxu0 0.0
        %1748 = vmatpush1.msra.mxu0 0.0
        %1749 = vmatprep.mubr.f32.mxu0 0.0
        %1750 = vmatmul.mubr.f32.gmra.mrb[0].mxu0 %v361
        %v1751 = vpop.f32.mrb[0].mxu0
        %v1752 = vadd.f32 0.0, %v1751
        %v1753 = vpop.f32.mrb[0].mxu0
        %1754 = vdwg.mxu0
        %vm1755 = vcmp.ge.f32.partialorder %v1752, 0.0
        %v1756 = vmul.f32 %v434, %v1752
        %v1757 = vsel %vm1755, %v1752, %v1756
        %v1759 = vsel %vm462, %v1757, 0
        %1761 = vmatprep.subr.mxu0 0.0
        %1762 = vmatpush1.msra.mxu0 %v1759
        %1763 = vmatprep.subr.mxu0 0.0
        %1764 = vmatpush1.msra.mxu0 0.0
        %1765 = vmatprep.subr.mxu0 0.0
        %1766 = vmatpush1.msra.mxu0 0.0
        %1767 = vmatprep.subr.mxu0 0.0
        %1768 = vmatpush1.msra.mxu0 0.0
        %1769 = vmatprep.subr.mxu0 0.0
        %1770 = vmatpush1.msra.mxu0 0.0
        %1771 = vmatprep.subr.mxu0 0.0
        %1772 = vmatpush1.msra.mxu0 0.0
        %1773 = vmatprep.subr.mxu0 0.0
        %1774 = vmatpush1.msra.mxu0 0.0
        %1775 = vmatprep.subr.mxu0 0.0
        %1776 = vmatpush1.msra.mxu0 0.0
        %1777 = vmatprep.subr.mxu0 0.0
        %1778 = vmatpush1.msra.mxu0 0.0
        %1779 = vmatprep.subr.mxu0 0.0
        %1780 = vmatpush1.msra.mxu0 0.0
        %1781 = vmatprep.subr.mxu0 0.0
        %1782 = vmatpush1.msra.mxu0 0.0
        %1783 = vmatprep.subr.mxu0 0.0
        %1784 = vmatpush1.msra.mxu0 0.0
        %1785 = vmatprep.subr.mxu0 0.0
        %1786 = vmatpush1.msra.mxu0 0.0
        %1787 = vmatprep.subr.mxu0 0.0
        %1788 = vmatpush1.msra.mxu0 0.0
        %1789 = vmatprep.subr.mxu0 0.0
        %1790 = vmatpush1.msra.mxu0 0.0
        %1791 = vmatprep.subr.mxu0 0.0
        %1792 = vmatpush1.msra.mxu0 0.0
        %1793 = vmatprep.subr.mxu0 0.0
        %1794 = vmatpush1.msra.mxu0 0.0
        %1795 = vmatprep.subr.mxu0 0.0
        %1796 = vmatpush1.msra.mxu0 0.0
        %1797 = vmatprep.subr.mxu0 0.0
        %1798 = vmatpush1.msra.mxu0 0.0
        %1799 = vmatprep.subr.mxu0 0.0
        %1800 = vmatpush1.msra.mxu0 0.0
        %1801 = vmatprep.subr.mxu0 0.0
        %1802 = vmatpush1.msra.mxu0 0.0
        %1803 = vmatprep.subr.mxu0 0.0
        %1804 = vmatpush1.msra.mxu0 0.0
        %1805 = vmatprep.subr.mxu0 0.0
        %1806 = vmatpush1.msra.mxu0 0.0
        %1807 = vmatprep.subr.mxu0 0.0
        %1808 = vmatpush1.msra.mxu0 0.0
        %1809 = vmatprep.subr.mxu0 0.0
        %1810 = vmatpush1.msra.mxu0 0.0
        %1811 = vmatprep.subr.mxu0 0.0
        %1812 = vmatpush1.msra.mxu0 0.0
        %1813 = vmatprep.subr.mxu0 0.0
        %1814 = vmatpush1.msra.mxu0 0.0
        %1815 = vmatprep.subr.mxu0 0.0
        %1816 = vmatpush1.msra.mxu0 0.0
        %1817 = vmatprep.subr.mxu0 0.0
        %1818 = vmatpush1.msra.mxu0 0.0
        %1819 = vmatprep.subr.mxu0 0.0
        %1820 = vmatpush1.msra.mxu0 0.0
        %1821 = vmatprep.subr.mxu0 0.0
        %1822 = vmatpush1.msra.mxu0 0.0
        %1823 = vmatprep.subr.mxu0 0.0
        %1824 = vmatpush1.msra.mxu0 0.0
        %1825 = vmatprep.mubr.f32.mxu0 0.0
        %1826 = vmatmul.mubr.f32.gmra.mrb[0].mxu0 %v439
        %v1827 = vpop.f32.mrb[0].mxu0
        %v1828 = vadd.f32 0.0, %v1827
        %v1829 = vpop.f32.mrb[0].mxu0
        %1830 = vmatprep.mubr.f32.mxu0 0.0
        %1831 = vmatmul.mubr.f32.gmra.mrb[0].mxu0 %v442
        %v1832 = vpop.f32.mrb[0].mxu0
        %v1833 = vadd.f32 0.0, %v1832
        %v1834 = vpop.f32.mrb[0].mxu0
        %1835 = vmatprep.mubr.f32.mxu0 0.0
        %1836 = vmatmul.mubr.f32.gmra.mrb[0].mxu0 %v445
        %v1837 = vpop.f32.mrb[0].mxu0
        %v1838 = vadd.f32 0.0, %v1837
        %v1839 = vpop.f32.mrb[0].mxu0
        %1840 = vmatprep.mubr.f32.mxu0 0.0
        %1841 = vmatmul.mubr.f32.gmra.mrb[0].mxu0 %v448
        %v1842 = vpop.f32.mrb[0].mxu0
        %v1843 = vadd.f32 0.0, %v1842
        %v1844 = vpop.f32.mrb[0].mxu0
        %1845 = vmatprep.mubr.f32.mxu0 0.0
        %1846 = vmatmul.mubr.f32.gmra.mrb[0].mxu0 %v451
        %v1847 = vpop.f32.mrb[0].mxu0
        %v1848 = vadd.f32 0.0, %v1847
        %v1849 = vpop.f32.mrb[0].mxu0
        %1850 = vmatprep.mubr.f32.mxu0 0.0
        %1851 = vmatmul.mubr.f32.gmra.mrb[0].mxu0 %v454
        %v1852 = vpop.f32.mrb[0].mxu0
        %v1853 = vadd.f32 0.0, %v1852
        %v1854 = vpop.f32.mrb[0].mxu0
        %1855 = vmatprep.mubr.f32.mxu0 0.0
        %1856 = vmatmul.mubr.f32.gmra.mrb[0].mxu0 %v457
        %v1857 = vpop.f32.mrb[0].mxu0
        %v1858 = vadd.f32 0.0, %v1857
        %v1859 = vpop.f32.mrb[0].mxu0
        %1860 = vmatprep.mubr.f32.mxu0 0.0
        %1861 = vmatmul.mubr.f32.gmra.mrb[0].mxu0 %v460
        %v1862 = vpop.f32.mrb[0].mxu0
        %v1863 = vadd.f32 0.0, %v1862
        %v1864 = vpop.f32.mrb[0].mxu0
        %1865 = vdwg.mxu0
        %v1866 = vxor.u32 %v1828, 2147483648
        %v1867 = vxor.u32 %v1833, 2147483648
        %v1868 = vxor.u32 %v1838, 2147483648
        %v1869 = vxor.u32 %v1843, 2147483648
        %v1870 = vxor.u32 %v1848, 2147483648
        %v1871 = vxor.u32 %v1853, 2147483648
        %v1872 = vxor.u32 %v1858, 2147483648
        %v1873 = vxor.u32 %v1863, 2147483648
        %v1874 = vmul.f32 %v1866, 1.442695
        %v1875 = vpow.pop %v1874
        %v1876 = vmul.f32 %v1867, 1.442695
        %v1877 = vpow.pop %v1876
        %v1878 = vmul.f32 %v1868, 1.442695
        %v1879 = vpow.pop %v1878
        %v1880 = vmul.f32 %v1869, 1.442695
        %v1881 = vpow.pop %v1880
        %v1882 = vmul.f32 %v1870, 1.442695
        %v1883 = vpow.pop %v1882
        %v1884 = vmul.f32 %v1871, 1.442695
        %v1885 = vpow.pop %v1884
        %v1886 = vmul.f32 %v1872, 1.442695
        %v1887 = vpow.pop %v1886
        %v1888 = vmul.f32 %v1873, 1.442695
        %v1889 = vpow.pop %v1888
        %v1890 = vadd.f32 %v1875, 1.0
        %v1891 = vadd.f32 %v1877, 1.0
        %v1892 = vadd.f32 %v1879, 1.0
        %v1893 = vadd.f32 %v1881, 1.0
        %v1894 = vadd.f32 %v1883, 1.0
        %v1895 = vadd.f32 %v1885, 1.0
        %v1896 = vadd.f32 %v1887, 1.0
        %v1897 = vadd.f32 %v1889, 1.0
        %v1898 = vrcp.pop %v1890
        %v1899 = vmul.f32 1.0, %v1898
        %v1900 = vrcp.pop %v1891
        %v1901 = vmul.f32 1.0, %v1900
        %v1902 = vrcp.pop %v1892
        %v1903 = vmul.f32 1.0, %v1902
        %v1904 = vrcp.pop %v1893
        %v1905 = vmul.f32 1.0, %v1904
        %v1906 = vrcp.pop %v1894
        %v1907 = vmul.f32 1.0, %v1906
        %v1908 = vrcp.pop %v1895
        %v1909 = vmul.f32 1.0, %v1908
        %v1910 = vrcp.pop %v1896
        %v1911 = vmul.f32 1.0, %v1910
        %v1912 = vrcp.pop %v1897
        %v1913 = vmul.f32 1.0, %v1912
        %1915 = vset.pattern.permute.xlu0 0
        %1916 = vperm.xlu0 %1915, %v1899
        %v1917 = vpop.permute.xlu0 %1916
        %1920 = vset.pattern.permute.xlu0 0
        %1921 = vperm.xlu0 %1920, %v1901
        %v1922 = vpop.permute.xlu0 %1921
        %1925 = vset.pattern.permute.xlu0 0
        %1926 = vperm.xlu0 %1925, %v1903
        %v1927 = vpop.permute.xlu0 %1926
        %1930 = vset.pattern.permute.xlu0 0
        %1931 = vperm.xlu0 %1930, %v1905
        %v1932 = vpop.permute.xlu0 %1931
        %1935 = vset.pattern.permute.xlu0 0
        %1936 = vperm.xlu0 %1935, %v1907
        %v1937 = vpop.permute.xlu0 %1936
        %1940 = vset.pattern.permute.xlu0 0
        %1941 = vperm.xlu0 %1940, %v1909
        %v1942 = vpop.permute.xlu0 %1941
        %1945 = vset.pattern.permute.xlu0 0
        %1946 = vperm.xlu0 %1945, %v1911
        %v1947 = vpop.permute.xlu0 %1946
        %1950 = vset.pattern.permute.xlu0 0
        %1951 = vperm.xlu0 %1950, %v1913
        %v1952 = vpop.permute.xlu0 %1951
        %v1954 = vmul.f32 %v1556, %v1917
        %v1955 = vmul.f32 %v1557, %v1917
        %v1956 = vmul.f32 %v1558, %v1922
        %v1957 = vmul.f32 %v1559, %v1922
        %v1958 = vmul.f32 %v1560, %v1927
        %v1959 = vmul.f32 %v1561, %v1927
        %v1960 = vmul.f32 %v1562, %v1932
        %v1961 = vmul.f32 %v1563, %v1932
        %v1962 = vmul.f32 %v1564, %v1937
        %v1963 = vmul.f32 %v1565, %v1937
        %v1964 = vmul.f32 %v1566, %v1942
        %v1965 = vmul.f32 %v1567, %v1942
        %v1966 = vmul.f32 %v1568, %v1947
        %v1967 = vmul.f32 %v1569, %v1947
        %v1968 = vmul.f32 %v1570, %v1952
        %v1969 = vmul.f32 %v1571, %v1952
        %s1970 = scalar_lea.vmem %s217, 384 [#allocation6]
        %1971 = vst [vmem:[%s1970] sm:$0xff] %v1954
        %1972 = vst [vmem:[%s1970 + $0x8] sm:$0xff] %v1955
        %1973 = vst [vmem:[%s1970 + $0x10] sm:$0xff] %v1956
        %1974 = vst [vmem:[%s1970 + $0x18] sm:$0xff] %v1957
        %1975 = vst [vmem:[%s1970 + $0x20] sm:$0xff] %v1958
        %1976 = vst [vmem:[%s1970 + $0x28] sm:$0xff] %v1959
        %1977 = vst [vmem:[%s1970 + $0x30] sm:$0xff] %v1960
        %1978 = vst [vmem:[%s1970 + $0x38] sm:$0xff] %v1961
        %1979 = vst [vmem:[%s1970 + $0x40] sm:$0xff] %v1962
        %1980 = vst [vmem:[%s1970 + $0x48] sm:$0xff] %v1963
        %1981 = vst [vmem:[%s1970 + $0x50] sm:$0xff] %v1964
        %1982 = vst [vmem:[%s1970 + $0x58] sm:$0xff] %v1965
        %1983 = vst [vmem:[%s1970 + $0x60] sm:$0xff] %v1966
        %1984 = vst [vmem:[%s1970 + $0x68] sm:$0xff] %v1967
        %1985 = vst [vmem:[%s1970 + $0x70] sm:$0xff] %v1968
        %1986 = vst [vmem:[%s1970 + $0x78] sm:$0xff] %v1969
        %s1987 = sand.u32 %s119, 1
        %s1988 = scalar_lea.sflag [#allocation5], %s1987
        %s1989 = sand.u32 %s119, 1
        %s1990 = smul.addr %s1989, 512
        %s1991 = scalar_lea.vmem [#allocation6], %s1990
        // Predicated region
        $region41: #{tpu_custom_call.1} parent=35 // pred_check
          %p1992 = pneg %p129
        $region42: #{tpu_custom_call.1} parent=35 // pred_check_branch
          %1994 = sbr.rel (%p1992) target = $region44
        $region43: #{tpu_custom_call.1} parent=35 // pred_region
          %s1995 = smul.u32 4, %s22
          %s1997 = ssub.s32 8192, 8192
          %1998 = vsyncadd %s1988, %s1997
          %s1999 = smul.addr %s1995, 16
          %s2000 = smul.addr %s1999, 128
          %s2001 = scalar_lea.hbm %s4, %s2000
          %s2002 = sshll.u32 %s1991, 4
          %s2003 = int_to_ptr.vmem [resolvable:$true] %s2002
          %2008 = dma.vmem_to_hbm [thread:$0]  %s2003, 8192, %s2001, %s1988, 256, 256, 16
        $region44: #{tpu_custom_call.1} parent=35 // pred_fallthru
          _
      $region36: #{tpu_custom_call.1} parent=5 // pred_fallthru
        _
      %p2009 = scmp.le.s32.totalorder 2, %s17
      // Predicated region
      $region45: #{tpu_custom_call.1} parent=5 // pred_check
        %p2010 = pneg %p2009
      $region46: #{tpu_custom_call.1} parent=5 // pred_check_branch
        %2012 = sbr.rel (%p2010) target = $region48
      $region47: #{tpu_custom_call.1} parent=5 // pred_region
        %s2013 = ssub.s32 %s17, 2
        // Predicated region
        $region49: #{tpu_custom_call.1} parent=47 // pred_check
          %p2014 = pneg %p135
        $region50: #{tpu_custom_call.1} parent=47 // pred_check_branch
          %2016 = sbr.rel (%p2014) target = $region52
        $region51: #{tpu_custom_call.1} parent=47 // pred_region
          %s2017 = sand.u32 %s120, 1
          %s2018 = scalar_lea.sflag [#allocation5], %s2017
          %s2019 = sand.u32 %s120, 1
          %s2020 = smul.addr %s2019, 512
          %s2021 = scalar_lea.vmem [#allocation6], %s2020
          %2022 = dma.done %s2018, 8192
        $region52: #{tpu_custom_call.1} parent=47 // pred_fallthru
          _
      $region48: #{tpu_custom_call.1} parent=5 // pred_fallthru
        _
    $region6: #{tpu_custom_call.1} parent=1 // loop_footer
      %s21 = sadd.s32 1, %s17
    $region7: #{tpu_custom_call.1} parent=1 // loop_footer_branch
      %16 = sbr.rel target = $region3
    $region8: #{tpu_custom_call.1} parent=1 // loop_exit
      _
    %2023 = vsyncpa [#allocation4], 1
    %s2024 = scalar_lea.sflag [#allocation4], 1
    %2025 = vsyncpa %s2024, 1
    %2026 = vsyncpa [#allocation5], 1
    %s2027 = scalar_lea.sflag [#allocation5], 1
    %2028 = vsyncpa %s2027, 1

</llo_original>
